<compile_context>
chip_gen: v6e
topology: v6e:2x2x1
jax: 0.10.0
libtpu: 0.0.40
codegen_flags: <defaults>
</compile_context>

<pallas_src>
import jax
import jax.numpy as jnp
from jax import lax
from jax.experimental import pallas as pl
from jax.experimental.pallas import tpu as pltpu


# ------------------------------ Pallas kernel --------------------------------
def _omni_shift_kernel(xp_ref, w_ref, o_ref):
    """Depthwise 5x5 conv on one image, lane-flattened layout.

    xp_ref: (1, H+4, (W+4)*C)  zero-padded input, (w, c) flattened on lanes
    w_ref : (25, (W+4)*C)      tap (di*5+dj) weight, tiled (W+4) times along w
    o_ref : (1, H,  W*C)
    """
    H = o_ref.shape[1]
    WC = o_ref.shape[2]
    WpC = xp_ref.shape[2]
    C = (WpC - WC) // 4          # (W+4) - W == 4

    # Stage the 5 vertical windows once (one sublane-sliced copy per di,
    # reused by all 5 horizontal taps).
    rows = [xp_ref[0, di:di + H, :].astype(jnp.float32) for di in range(5)]

    out = jnp.zeros((H, WC), jnp.float32)
    for dj in range(5):                           # horizontal tap
        acc = rows[0] * w_ref[0 * 5 + dj][None, :]
        for di in range(1, 5):                    # vertical taps
            acc = acc + rows[di] * w_ref[di * 5 + dj][None, :]
        # acc[h, w'*C + c] = sum_di x[h+di, w', c] * w[c, di, dj]; the output
        # needs it at w' = w + dj -> a single lane shift by dj*C per dj.
        out = out + acc[:, dj * C: dj * C + WC]
    o_ref[0] = out.astype(o_ref.dtype)


def omni_shift(x, weight):
    """OmniShift forward (eval path): depthwise 5x5, padding=2, groups=C.

    x:      (B, C, H, W)  NCHW, matching the PyTorch module
    weight: (C, 5, 5)     reparameterized depthwise kernel
    returns (B, C, H, W)
    """
    B, C, H, W = x.shape
    Hp, Wp = H + 4, W + 4

    # Layout plumbing in the wrapper (cheap XLA ops): NCHW -> NHWC, pad,
    # flatten (W, C) onto the lane axis so the kernel is lane-dense.
    x_nhwc = jnp.transpose(x, (0, 2, 3, 1))
    x_pad = jnp.pad(x_nhwc, ((0, 0), (2, 2), (2, 2), (0, 0)))
    x_flat = x_pad.reshape(B, Hp, Wp * C)

    # Pre-broadcast the 25 depthwise taps to the flattened lane layout
    # (hoists all in-kernel weight broadcasts out of the 5x5 loop).
    w_taps = jnp.transpose(weight, (1, 2, 0)).reshape(25, 1, C)
    w_taps = jnp.broadcast_to(w_taps, (25, Wp, C)).reshape(25, Wp * C)
    w_taps = w_taps.astype(jnp.float32)

    out_flat = pl.pallas_call(
        _omni_shift_kernel,
        out_shape=jax.ShapeDtypeStruct((B, H, W * C), x.dtype),
        grid=(B,),
        in_specs=[
            pl.BlockSpec((1, Hp, Wp * C), lambda b: (b, 0, 0)),
            pl.BlockSpec((25, Wp * C), lambda b: (0, 0)),
        ],
        out_specs=pl.BlockSpec((1, H, W * C), lambda b: (b, 0, 0)),
        compiler_params=pltpu.CompilerParams(
            dimension_semantics=("parallel",)),
    )(x_flat, w_taps)

    out_nhwc = out_flat.reshape(B, H, W, C)
    return jnp.transpose(out_nhwc, (0, 3, 1, 2))       # back to NCHW


# ---------------------- reparameterization (wrapper) -------------------------
def reparam_combined_weight(alpha, w1x1, w3x3, w5x5):
    """OmniShift.reparam_5x5: fold the identity/1x1/3x3/5x5 branches into one
    5x5 depthwise kernel.  PyTorch conv weights are (C, 1, k, k)."""
    C = w5x5.shape[0]
    ident = jnp.zeros((C, 5, 5), jnp.float32).at[:, 2, 2].set(1.0)
    p1 = jnp.zeros((C, 5, 5), jnp.float32).at[:, 2, 2].set(w1x1.reshape(C))
    p3 = jnp.pad(w3x3.reshape(C, 3, 3), ((0, 0), (1, 1), (1, 1)))
    return (alpha[0] * ident + alpha[1] * p1 + alpha[2] * p3
            + alpha[3] * w5x5.reshape(C, 5, 5))


# ---------------------------- pure-JAX reference -----------------------------
def omni_shift_ref(x, weight):
    C = x.shape[1]
    w = weight[:, None, :, :]                      # (C, 1, 5, 5) OIHW
    return lax.conv_general_dilated(
        x, w, window_strides=(1, 1), padding=((2, 2), (2, 2)),
        dimension_numbers=("NCHW", "OIHW", "NCHW"),
        feature_group_count=C, precision=lax.Precision.HIGHEST)


if __name__ == "__main__":
    B, C, H, W = 2, 32, 16, 16        # dim=32; W*C = 512 -> lane-dense blocks

    key = jax.random.PRNGKey(0)
    ka, k1, k3, k5, kx = jax.random.split(key, 5)
    alpha = jax.random.normal(ka, (4,), jnp.float32)
    w1x1 = jax.random.normal(k1, (C, 1, 1, 1), jnp.float32) * 0.2
    w3x3 = jax.random.normal(k3, (C, 1, 3, 3), jnp.float32) * 0.2
    w5x5 = jax.random.normal(k5, (C, 1, 5, 5), jnp.float32) * 0.2
    x = jax.random.normal(kx, (B, C, H, W), jnp.float32)

    combined = reparam_combined_weight(alpha, w1x1, w3x3, w5x5)

    out = jax.block_until_ready(omni_shift(x, combined))
    ref = jax.block_until_ready(omni_shift_ref(x, combined))

    assert out.shape == (B, C, H, W)
    err = float(jnp.max(jnp.abs(out - ref)))
    assert jnp.allclose(out, ref, rtol=1e-4, atol=1e-4), err
    print("KERNEL_OK")
</pallas_src>

<mosaic_0001>
module attributes {stable_mosaic.version = 11 : i64} {
  func.func @_omni_shift_kernel(%arg0: i32, %arg1: memref<1x20x640xf32, #tpu.memory_space<vmem>>, %arg2: memref<25x640xf32, #tpu.memory_space<vmem>>, %arg3: memref<1x16x512xf32, #tpu.memory_space<vmem>>) attributes {dimension_semantics = [#tpu.dimension_semantics<parallel>], iteration_bounds = array<i64: 2>, scalar_prefetch = 0 : i64, scratch_operands = 0 : i64, tpu.core_type = #tpu.core_type<tc>, window_params = [{transform_indices = @transform_0, window_bounds = array<i64: 1, 20, 640>}, {pipeline_mode = #tpu.pipeline_mode<synchronous>, transform_indices = @transform_1, window_bounds = array<i64: 25, 640>}, {transform_indices = @transform_2, window_bounds = array<i64: 1, 16, 512>}]} {
    %c0 = arith.constant 0 : index
    %c0_0 = arith.constant 0 : index
    %c0_1 = arith.constant 0 : index
    %0 = vector.load %arg1[%c0, %c0_0, %c0_1] : memref<1x20x640xf32, #tpu.memory_space<vmem>>, vector<1x16x640xf32>
    %1 = vector.shape_cast %0 : vector<1x16x640xf32> to vector<16x640xf32>
    %c0_2 = arith.constant 0 : index
    %c1 = arith.constant 1 : index
    %c0_3 = arith.constant 0 : index
    %2 = vector.load %arg1[%c0_2, %c1, %c0_3] : memref<1x20x640xf32, #tpu.memory_space<vmem>>, vector<1x16x640xf32>
    %3 = vector.shape_cast %2 : vector<1x16x640xf32> to vector<16x640xf32>
    %c0_4 = arith.constant 0 : index
    %c2 = arith.constant 2 : index
    %c0_5 = arith.constant 0 : index
    %4 = vector.load %arg1[%c0_4, %c2, %c0_5] : memref<1x20x640xf32, #tpu.memory_space<vmem>>, vector<1x16x640xf32>
    %5 = vector.shape_cast %4 : vector<1x16x640xf32> to vector<16x640xf32>
    %c0_6 = arith.constant 0 : index
    %c3 = arith.constant 3 : index
    %c0_7 = arith.constant 0 : index
    %6 = vector.load %arg1[%c0_6, %c3, %c0_7] : memref<1x20x640xf32, #tpu.memory_space<vmem>>, vector<1x16x640xf32>
    %7 = vector.shape_cast %6 : vector<1x16x640xf32> to vector<16x640xf32>
    %c0_8 = arith.constant 0 : index
    %c4 = arith.constant 4 : index
    %c0_9 = arith.constant 0 : index
    %8 = vector.load %arg1[%c0_8, %c4, %c0_9] : memref<1x20x640xf32, #tpu.memory_space<vmem>>, vector<1x16x640xf32>
    %9 = vector.shape_cast %8 : vector<1x16x640xf32> to vector<16x640xf32>
    %cst = arith.constant 0.000000e+00 : f32
    %10 = vector.broadcast %cst : f32 to vector<16x512xf32>
    %c0_10 = arith.constant 0 : index
    %c0_11 = arith.constant 0 : index
    %11 = vector.load %arg2[%c0_10, %c0_11] : memref<25x640xf32, #tpu.memory_space<vmem>>, vector<1x640xf32>
    %12 = vector.shape_cast %11 : vector<1x640xf32> to vector<640xf32>
    %13 = vector.shape_cast %12 : vector<640xf32> to vector<1x640xf32>
    %14 = vector.broadcast %13 : vector<1x640xf32> to vector<16x640xf32>
    %15 = arith.mulf %1, %14 : vector<16x640xf32>
    %c5 = arith.constant 5 : index
    %c0_12 = arith.constant 0 : index
    %16 = vector.load %arg2[%c5, %c0_12] : memref<25x640xf32, #tpu.memory_space<vmem>>, vector<1x640xf32>
    %17 = vector.shape_cast %16 : vector<1x640xf32> to vector<640xf32>
    %18 = vector.shape_cast %17 : vector<640xf32> to vector<1x640xf32>
    %19 = vector.broadcast %18 : vector<1x640xf32> to vector<16x640xf32>
    %20 = arith.mulf %3, %19 : vector<16x640xf32>
    %21 = arith.addf %15, %20 : vector<16x640xf32>
    %c10 = arith.constant 10 : index
    %c0_13 = arith.constant 0 : index
    %22 = vector.load %arg2[%c10, %c0_13] : memref<25x640xf32, #tpu.memory_space<vmem>>, vector<1x640xf32>
    %23 = vector.shape_cast %22 : vector<1x640xf32> to vector<640xf32>
    %24 = vector.shape_cast %23 : vector<640xf32> to vector<1x640xf32>
    %25 = vector.broadcast %24 : vector<1x640xf32> to vector<16x640xf32>
    %26 = arith.mulf %5, %25 : vector<16x640xf32>
    %27 = arith.addf %21, %26 : vector<16x640xf32>
    %c15 = arith.constant 15 : index
    %c0_14 = arith.constant 0 : index
    %28 = vector.load %arg2[%c15, %c0_14] : memref<25x640xf32, #tpu.memory_space<vmem>>, vector<1x640xf32>
    %29 = vector.shape_cast %28 : vector<1x640xf32> to vector<640xf32>
    %30 = vector.shape_cast %29 : vector<640xf32> to vector<1x640xf32>
    %31 = vector.broadcast %30 : vector<1x640xf32> to vector<16x640xf32>
    %32 = arith.mulf %7, %31 : vector<16x640xf32>
    %33 = arith.addf %27, %32 : vector<16x640xf32>
    %c20 = arith.constant 20 : index
    %c0_15 = arith.constant 0 : index
    %34 = vector.load %arg2[%c20, %c0_15] : memref<25x640xf32, #tpu.memory_space<vmem>>, vector<1x640xf32>
    %35 = vector.shape_cast %34 : vector<1x640xf32> to vector<640xf32>
    %36 = vector.shape_cast %35 : vector<640xf32> to vector<1x640xf32>
    %37 = vector.broadcast %36 : vector<1x640xf32> to vector<16x640xf32>
    %38 = arith.mulf %9, %37 : vector<16x640xf32>
    %39 = arith.addf %33, %38 : vector<16x640xf32>
    %40 = vector.extract_strided_slice %39 {offsets = [0, 0], sizes = [16, 512], strides = [1, 1]} : vector<16x640xf32> to vector<16x512xf32>
    %41 = arith.addf %10, %40 : vector<16x512xf32>
    %c1_16 = arith.constant 1 : index
    %c0_17 = arith.constant 0 : index
    %42 = vector.load %arg2[%c1_16, %c0_17] : memref<25x640xf32, #tpu.memory_space<vmem>>, vector<1x640xf32>
    %43 = vector.shape_cast %42 : vector<1x640xf32> to vector<640xf32>
    %44 = vector.shape_cast %43 : vector<640xf32> to vector<1x640xf32>
    %45 = vector.broadcast %44 : vector<1x640xf32> to vector<16x640xf32>
    %46 = arith.mulf %1, %45 : vector<16x640xf32>
    %c6 = arith.constant 6 : index
    %c0_18 = arith.constant 0 : index
    %47 = vector.load %arg2[%c6, %c0_18] : memref<25x640xf32, #tpu.memory_space<vmem>>, vector<1x640xf32>
    %48 = vector.shape_cast %47 : vector<1x640xf32> to vector<640xf32>
    %49 = vector.shape_cast %48 : vector<640xf32> to vector<1x640xf32>
    %50 = vector.broadcast %49 : vector<1x640xf32> to vector<16x640xf32>
    %51 = arith.mulf %3, %50 : vector<16x640xf32>
    %52 = arith.addf %46, %51 : vector<16x640xf32>
    %c11 = arith.constant 11 : index
    %c0_19 = arith.constant 0 : index
    %53 = vector.load %arg2[%c11, %c0_19] : memref<25x640xf32, #tpu.memory_space<vmem>>, vector<1x640xf32>
    %54 = vector.shape_cast %53 : vector<1x640xf32> to vector<640xf32>
    %55 = vector.shape_cast %54 : vector<640xf32> to vector<1x640xf32>
    %56 = vector.broadcast %55 : vector<1x640xf32> to vector<16x640xf32>
    %57 = arith.mulf %5, %56 : vector<16x640xf32>
    %58 = arith.addf %52, %57 : vector<16x640xf32>
    %c16 = arith.constant 16 : index
    %c0_20 = arith.constant 0 : index
    %59 = vector.load %arg2[%c16, %c0_20] : memref<25x640xf32, #tpu.memory_space<vmem>>, vector<1x640xf32>
    %60 = vector.shape_cast %59 : vector<1x640xf32> to vector<640xf32>
    %61 = vector.shape_cast %60 : vector<640xf32> to vector<1x640xf32>
    %62 = vector.broadcast %61 : vector<1x640xf32> to vector<16x640xf32>
    %63 = arith.mulf %7, %62 : vector<16x640xf32>
    %64 = arith.addf %58, %63 : vector<16x640xf32>
    %c21 = arith.constant 21 : index
    %c0_21 = arith.constant 0 : index
    %65 = vector.load %arg2[%c21, %c0_21] : memref<25x640xf32, #tpu.memory_space<vmem>>, vector<1x640xf32>
    %66 = vector.shape_cast %65 : vector<1x640xf32> to vector<640xf32>
    %67 = vector.shape_cast %66 : vector<640xf32> to vector<1x640xf32>
    %68 = vector.broadcast %67 : vector<1x640xf32> to vector<16x640xf32>
    %69 = arith.mulf %9, %68 : vector<16x640xf32>
    %70 = arith.addf %64, %69 : vector<16x640xf32>
    %71 = vector.extract_strided_slice %70 {offsets = [0, 32], sizes = [16, 512], strides = [1, 1]} : vector<16x640xf32> to vector<16x512xf32>
    %72 = arith.addf %41, %71 : vector<16x512xf32>
    %c2_22 = arith.constant 2 : index
    %c0_23 = arith.constant 0 : index
    %73 = vector.load %arg2[%c2_22, %c0_23] : memref<25x640xf32, #tpu.memory_space<vmem>>, vector<1x640xf32>
    %74 = vector.shape_cast %73 : vector<1x640xf32> to vector<640xf32>
    %75 = vector.shape_cast %74 : vector<640xf32> to vector<1x640xf32>
    %76 = vector.broadcast %75 : vector<1x640xf32> to vector<16x640xf32>
    %77 = arith.mulf %1, %76 : vector<16x640xf32>
    %c7 = arith.constant 7 : index
    %c0_24 = arith.constant 0 : index
    %78 = vector.load %arg2[%c7, %c0_24] : memref<25x640xf32, #tpu.memory_space<vmem>>, vector<1x640xf32>
    %79 = vector.shape_cast %78 : vector<1x640xf32> to vector<640xf32>
    %80 = vector.shape_cast %79 : vector<640xf32> to vector<1x640xf32>
    %81 = vector.broadcast %80 : vector<1x640xf32> to vector<16x640xf32>
    %82 = arith.mulf %3, %81 : vector<16x640xf32>
    %83 = arith.addf %77, %82 : vector<16x640xf32>
    %c12 = arith.constant 12 : index
    %c0_25 = arith.constant 0 : index
    %84 = vector.load %arg2[%c12, %c0_25] : memref<25x640xf32, #tpu.memory_space<vmem>>, vector<1x640xf32>
    %85 = vector.shape_cast %84 : vector<1x640xf32> to vector<640xf32>
    %86 = vector.shape_cast %85 : vector<640xf32> to vector<1x640xf32>
    %87 = vector.broadcast %86 : vector<1x640xf32> to vector<16x640xf32>
    %88 = arith.mulf %5, %87 : vector<16x640xf32>
    %89 = arith.addf %83, %88 : vector<16x640xf32>
    %c17 = arith.constant 17 : index
    %c0_26 = arith.constant 0 : index
    %90 = vector.load %arg2[%c17, %c0_26] : memref<25x640xf32, #tpu.memory_space<vmem>>, vector<1x640xf32>
    %91 = vector.shape_cast %90 : vector<1x640xf32> to vector<640xf32>
    %92 = vector.shape_cast %91 : vector<640xf32> to vector<1x640xf32>
    %93 = vector.broadcast %92 : vector<1x640xf32> to vector<16x640xf32>
    %94 = arith.mulf %7, %93 : vector<16x640xf32>
    %95 = arith.addf %89, %94 : vector<16x640xf32>
    %c22 = arith.constant 22 : index
    %c0_27 = arith.constant 0 : index
    %96 = vector.load %arg2[%c22, %c0_27] : memref<25x640xf32, #tpu.memory_space<vmem>>, vector<1x640xf32>
    %97 = vector.shape_cast %96 : vector<1x640xf32> to vector<640xf32>
    %98 = vector.shape_cast %97 : vector<640xf32> to vector<1x640xf32>
    %99 = vector.broadcast %98 : vector<1x640xf32> to vector<16x640xf32>
    %100 = arith.mulf %9, %99 : vector<16x640xf32>
    %101 = arith.addf %95, %100 : vector<16x640xf32>
    %102 = vector.extract_strided_slice %101 {offsets = [0, 64], sizes = [16, 512], strides = [1, 1]} : vector<16x640xf32> to vector<16x512xf32>
    %103 = arith.addf %72, %102 : vector<16x512xf32>
    %c3_28 = arith.constant 3 : index
    %c0_29 = arith.constant 0 : index
    %104 = vector.load %arg2[%c3_28, %c0_29] : memref<25x640xf32, #tpu.memory_space<vmem>>, vector<1x640xf32>
    %105 = vector.shape_cast %104 : vector<1x640xf32> to vector<640xf32>
    %106 = vector.shape_cast %105 : vector<640xf32> to vector<1x640xf32>
    %107 = vector.broadcast %106 : vector<1x640xf32> to vector<16x640xf32>
    %108 = arith.mulf %1, %107 : vector<16x640xf32>
    %c8 = arith.constant 8 : index
    %c0_30 = arith.constant 0 : index
    %109 = vector.load %arg2[%c8, %c0_30] : memref<25x640xf32, #tpu.memory_space<vmem>>, vector<1x640xf32>
    %110 = vector.shape_cast %109 : vector<1x640xf32> to vector<640xf32>
    %111 = vector.shape_cast %110 : vector<640xf32> to vector<1x640xf32>
    %112 = vector.broadcast %111 : vector<1x640xf32> to vector<16x640xf32>
    %113 = arith.mulf %3, %112 : vector<16x640xf32>
    %114 = arith.addf %108, %113 : vector<16x640xf32>
    %c13 = arith.constant 13 : index
    %c0_31 = arith.constant 0 : index
    %115 = vector.load %arg2[%c13, %c0_31] : memref<25x640xf32, #tpu.memory_space<vmem>>, vector<1x640xf32>
    %116 = vector.shape_cast %115 : vector<1x640xf32> to vector<640xf32>
    %117 = vector.shape_cast %116 : vector<640xf32> to vector<1x640xf32>
    %118 = vector.broadcast %117 : vector<1x640xf32> to vector<16x640xf32>
    %119 = arith.mulf %5, %118 : vector<16x640xf32>
    %120 = arith.addf %114, %119 : vector<16x640xf32>
    %c18 = arith.constant 18 : index
    %c0_32 = arith.constant 0 : index
    %121 = vector.load %arg2[%c18, %c0_32] : memref<25x640xf32, #tpu.memory_space<vmem>>, vector<1x640xf32>
    %122 = vector.shape_cast %121 : vector<1x640xf32> to vector<640xf32>
    %123 = vector.shape_cast %122 : vector<640xf32> to vector<1x640xf32>
    %124 = vector.broadcast %123 : vector<1x640xf32> to vector<16x640xf32>
    %125 = arith.mulf %7, %124 : vector<16x640xf32>
    %126 = arith.addf %120, %125 : vector<16x640xf32>
    %c23 = arith.constant 23 : index
    %c0_33 = arith.constant 0 : index
    %127 = vector.load %arg2[%c23, %c0_33] : memref<25x640xf32, #tpu.memory_space<vmem>>, vector<1x640xf32>
    %128 = vector.shape_cast %127 : vector<1x640xf32> to vector<640xf32>
    %129 = vector.shape_cast %128 : vector<640xf32> to vector<1x640xf32>
    %130 = vector.broadcast %129 : vector<1x640xf32> to vector<16x640xf32>
    %131 = arith.mulf %9, %130 : vector<16x640xf32>
    %132 = arith.addf %126, %131 : vector<16x640xf32>
    %133 = vector.extract_strided_slice %132 {offsets = [0, 96], sizes = [16, 512], strides = [1, 1]} : vector<16x640xf32> to vector<16x512xf32>
    %134 = arith.addf %103, %133 : vector<16x512xf32>
    %c4_34 = arith.constant 4 : index
    %c0_35 = arith.constant 0 : index
    %135 = vector.load %arg2[%c4_34, %c0_35] : memref<25x640xf32, #tpu.memory_space<vmem>>, vector<1x640xf32>
    %136 = vector.shape_cast %135 : vector<1x640xf32> to vector<640xf32>
    %137 = vector.shape_cast %136 : vector<640xf32> to vector<1x640xf32>
    %138 = vector.broadcast %137 : vector<1x640xf32> to vector<16x640xf32>
    %139 = arith.mulf %1, %138 : vector<16x640xf32>
    %c9 = arith.constant 9 : index
    %c0_36 = arith.constant 0 : index
    %140 = vector.load %arg2[%c9, %c0_36] : memref<25x640xf32, #tpu.memory_space<vmem>>, vector<1x640xf32>
    %141 = vector.shape_cast %140 : vector<1x640xf32> to vector<640xf32>
    %142 = vector.shape_cast %141 : vector<640xf32> to vector<1x640xf32>
    %143 = vector.broadcast %142 : vector<1x640xf32> to vector<16x640xf32>
    %144 = arith.mulf %3, %143 : vector<16x640xf32>
    %145 = arith.addf %139, %144 : vector<16x640xf32>
    %c14 = arith.constant 14 : index
    %c0_37 = arith.constant 0 : index
    %146 = vector.load %arg2[%c14, %c0_37] : memref<25x640xf32, #tpu.memory_space<vmem>>, vector<1x640xf32>
    %147 = vector.shape_cast %146 : vector<1x640xf32> to vector<640xf32>
    %148 = vector.shape_cast %147 : vector<640xf32> to vector<1x640xf32>
    %149 = vector.broadcast %148 : vector<1x640xf32> to vector<16x640xf32>
    %150 = arith.mulf %5, %149 : vector<16x640xf32>
    %151 = arith.addf %145, %150 : vector<16x640xf32>
    %c19 = arith.constant 19 : index
    %c0_38 = arith.constant 0 : index
    %152 = vector.load %arg2[%c19, %c0_38] : memref<25x640xf32, #tpu.memory_space<vmem>>, vector<1x640xf32>
    %153 = vector.shape_cast %152 : vector<1x640xf32> to vector<640xf32>
    %154 = vector.shape_cast %153 : vector<640xf32> to vector<1x640xf32>
    %155 = vector.broadcast %154 : vector<1x640xf32> to vector<16x640xf32>
    %156 = arith.mulf %7, %155 : vector<16x640xf32>
    %157 = arith.addf %151, %156 : vector<16x640xf32>
    %c24 = arith.constant 24 : index
    %c0_39 = arith.constant 0 : index
    %158 = vector.load %arg2[%c24, %c0_39] : memref<25x640xf32, #tpu.memory_space<vmem>>, vector<1x640xf32>
    %159 = vector.shape_cast %158 : vector<1x640xf32> to vector<640xf32>
    %160 = vector.shape_cast %159 : vector<640xf32> to vector<1x640xf32>
    %161 = vector.broadcast %160 : vector<1x640xf32> to vector<16x640xf32>
    %162 = arith.mulf %9, %161 : vector<16x640xf32>
    %163 = arith.addf %157, %162 : vector<16x640xf32>
    %164 = vector.extract_strided_slice %163 {offsets = [0, 128], sizes = [16, 512], strides = [1, 1]} : vector<16x640xf32> to vector<16x512xf32>
    %165 = arith.addf %134, %164 : vector<16x512xf32>
    %c0_40 = arith.constant 0 : index
    %c0_41 = arith.constant 0 : index
    %c0_42 = arith.constant 0 : index
    %166 = vector.load %arg3[%c0_40, %c0_41, %c0_42] : memref<1x16x512xf32, #tpu.memory_space<vmem>>, vector<1x16x512xf32>
    %167 = vector.shape_cast %166 : vector<1x16x512xf32> to vector<16x512xf32>
    %168 = vector.shape_cast %165 : vector<16x512xf32> to vector<1x16x512xf32>
    tpu.vector_store %arg3[%c0_40, %c0_41, %c0_42], %168 {strides = array<i32>} : memref<1x16x512xf32, #tpu.memory_space<vmem>>, vector<1x16x512xf32>,
    return
  }
  func.func @transform_0(%arg0: i32) -> (i32, i32, i32) {
    %c0_i32 = arith.constant 0 : i32
    %c0_i32_0 = arith.constant 0 : i32
    %c0_i32_1 = arith.constant 0 : i32
    return %arg0, %c0_i32, %c0_i32_0 : i32, i32, i32
  }
  func.func @transform_1(%arg0: i32) -> (i32, i32) {
    %c0_i32 = arith.constant 0 : i32
    %c0_i32_0 = arith.constant 0 : i32
    %c0_i32_1 = arith.constant 0 : i32
    return %c0_i32, %c0_i32_0 : i32, i32
  }
  func.func @transform_2(%arg0: i32) -> (i32, i32, i32) {
    %c0_i32 = arith.constant 0 : i32
    %c0_i32_0 = arith.constant 0 : i32
    %c0_i32_1 = arith.constant 0 : i32
    return %arg0, %c0_i32, %c0_i32_0 : i32, i32, i32
  }
}

</mosaic_0001>

<llo_original>
// kernel: tpu_custom_call.1
$region0: #{tpu_custom_call.1}
  #allocation0 [shape = 'u32[]', space=smem, size = 0x4, offset = 0x4, fixed_abs, tag = 'smem constant byte address 0x4 - core index']
  #allocation1 [shape = 'u32[144,128]{1,0:T(1,128)}', space=vmem, size = 0x12000, scoped, tag = 'internal scratch']
  %s0 = inlined_call_operand.vmem [shape: f32[2,20,640], index: 0, kind: input, shape index: {}]
  %s1 = inlined_call_operand.vmem [shape: f32[25,640], index: 1, kind: input, shape index: {}]
  %s2 = inlined_call_operand.hbm [shape: f32[2,16,512], index: 2, kind: output, shape index: {}]
  %s3 = sld [smem:[#allocation0]]
  $region41: #{tpu_custom_call.1} parent=0
    _
  %s5 = ssub.s32 1, %s3
  %s6 = scalar_select 0, %s5, %s3
  $region1: #{tpu_custom_call.1} parent=0
    #allocation2 [shape = 'u8[65536]{0}', space=vmem, size = 0x10000, scoped, tag = 'output window, operand 0']
    #allocation3 [shape = 's32[2]{0}', space=sflag, size = 0x8, scoped, tag = 'scoped memory for tpu_custom_call.1']
    %7 = vsyncpa [#allocation3], 0
    %s8 = scalar_lea.sflag [#allocation3], 1
    %9 = vsyncpa %s8, 0
    loop: start=0, step=1, limit=4
    $region2: #{tpu_custom_call.1} parent=1 // loop_pre_header
      _
    $region3: #{tpu_custom_call.1} parent=1 // loop_header
      %s11 = sphi 0, %s15
      %p12 = scmp.ge.s32.totalorder %s11, 4
      %s21 = sphi 0, %s23
      %s24 = sphi 0, %s21
      %s25 = sphi 0, %s24
      %s41 = sphi 0, %s25
      %s45 = sphi 0, %s45
      %s47 = sphi 0, %s45
      %s48 = sphi 0, %s47
      %s62 = sphi 0, %s48
      %s68 = sphi 0, %s70
      %s71 = sphi 0, %s68
      %s72 = sphi 0, %s71
      %s88 = sphi 0, %s72
    $region4: #{tpu_custom_call.1} parent=1 // loop_header_branch
      %14 = sbr.rel (%p12) target = $region8
    $region5: #{tpu_custom_call.1} parent=1 // loop_body
      %s16 = ssub.s32 %s11, 1
      %s17 = ssub.s32 %s11, 2
      %s18 = sadd.s32 %s11, 1
      %s19 = ssub.s32 %s11, %s18
      %p20 = scmp.eq.s32.totalorder %s19, 0
      %s22 = sadd.s32 %s21, 1
      %s23 = scalar_select %p20, %s21, %s22
      %p26 = pneg %p20
      %p27 = scmp.eq.s32.totalorder %s11, 1
      %p28 = por %p26, %p27
      %p29 = scmp.ne.s32.totalorder %s21, %s24
      %p30 = scmp.eq.s32.totalorder %s11, 0
      %p31 = por %p29, %p30
      %p32 = scmp.ne.s32.totalorder %s21, %s24
      %p33 = scmp.eq.s32.totalorder %s16, 1
      %p34 = por %p32, %p33
      %p35 = scmp.ne.s32.totalorder %s24, %s25
      %p36 = scmp.eq.s32.totalorder %s16, 0
      %p37 = por %p35, %p36
      %p38 = scmp.ne.s32.totalorder %s24, %s25
      %p39 = scmp.eq.s32.totalorder %s17, 1
      %p40 = por %p38, %p39
      %p42 = scmp.ne.s32.totalorder %s25, %s41
      %p43 = scmp.eq.s32.totalorder %s17, 0
      %p44 = por %p42, %p43
      %s46 = sadd.s32 %s45, 1
      %p49 = scmp.eq.s32.totalorder %s11, 1
      %p50 = scmp.ne.s32.totalorder %s45, %s47
      %p51 = scmp.eq.s32.totalorder %s11, 0
      %p52 = por %p50, %p51
      %p53 = scmp.ne.s32.totalorder %s45, %s47
      %p54 = scmp.eq.s32.totalorder %s16, 1
      %p55 = por %p53, %p54
      %p56 = scmp.ne.s32.totalorder %s47, %s48
      %p57 = scmp.eq.s32.totalorder %s16, 0
      %p58 = por %p56, %p57
      %p59 = scmp.ne.s32.totalorder %s47, %s48
      %p60 = scmp.eq.s32.totalorder %s17, 1
      %p61 = por %p59, %p60
      %p63 = scmp.ne.s32.totalorder %s48, %s62
      %p64 = scmp.eq.s32.totalorder %s17, 0
      %p65 = por %p63, %p64
      %s66 = ssub.s32 %s11, %s18
      %p67 = scmp.eq.s32.totalorder %s66, 0
      %s69 = sadd.s32 %s68, 1
      %s70 = scalar_select %p67, %s68, %s69
      %p73 = pneg %p67
      %p74 = scmp.eq.s32.totalorder %s11, 1
      %p75 = por %p73, %p74
      %p76 = scmp.ne.s32.totalorder %s68, %s71
      %p77 = scmp.eq.s32.totalorder %s11, 0
      %p78 = por %p76, %p77
      %p79 = scmp.ne.s32.totalorder %s68, %s71
      %p80 = scmp.eq.s32.totalorder %s16, 1
      %p81 = por %p79, %p80
      %p82 = scmp.ne.s32.totalorder %s71, %s72
      %p83 = scmp.eq.s32.totalorder %s16, 0
      %p84 = por %p82, %p83
      %p85 = scmp.ne.s32.totalorder %s71, %s72
      %p86 = scmp.eq.s32.totalorder %s17, 1
      %p87 = por %p85, %p86
      %p89 = scmp.ne.s32.totalorder %s72, %s88
      %p90 = scmp.eq.s32.totalorder %s17, 0
      %p91 = por %p89, %p90
      %p92 = scmp.le.s32.totalorder 1, %s11
      %p93 = scmp.lt.s32.totalorder %s11, 3
      %p94 = pnand %p92, %p93
      %p95 = pneg %p94
      // Predicated region
      $region9: #{tpu_custom_call.1} parent=5 // pred_check
        _
      $region10: #{tpu_custom_call.1} parent=5 // pred_check_branch
        %97 = sbr.rel (%p94) target = $region12
      $region11: #{tpu_custom_call.1} parent=5 // pred_region
        %s98 = ssub.s32 %s11, 1
        // Predicated region
        $region13: #{tpu_custom_call.1} parent=11 // pred_check
          %p99 = pneg %p58
        $region14: #{tpu_custom_call.1} parent=11 // pred_check_branch
          %101 = sbr.rel (%p99) target = $region16
        $region15: #{tpu_custom_call.1} parent=11 // pred_region
          _
        $region16: #{tpu_custom_call.1} parent=11 // pred_fallthru
          _
      $region12: #{tpu_custom_call.1} parent=5 // pred_fallthru
        _
      %p102 = scmp.lt.s32.totalorder %s11, 2
      // Predicated region
      $region17: #{tpu_custom_call.1} parent=5 // pred_check
        %p103 = pneg %p102
      $region18: #{tpu_custom_call.1} parent=5 // pred_check_branch
        %105 = sbr.rel (%p103) target = $region20
      $region19: #{tpu_custom_call.1} parent=5 // pred_region
        // Predicated region
        $region21: #{tpu_custom_call.1} parent=19 // pred_check
          %p106 = pneg %p31
        $region22: #{tpu_custom_call.1} parent=19 // pred_check_branch
          %108 = sbr.rel (%p106) target = $region24
        $region23: #{tpu_custom_call.1} parent=19 // pred_region
          %p109 = scmp.lt.s32.totalorder %s11, 1
          %s110 = scalar_select %p109, %s11, 1
          %s111 = smul.addr %s110, 15
          %s112 = smul.addr %s111, 8
          %s113 = scalar_lea.vmem %s0, %s112
        $region24: #{tpu_custom_call.1} parent=19 // pred_fallthru
          _
      $region20: #{tpu_custom_call.1} parent=5 // pred_fallthru
        _
      %p114 = scmp.le.s32.totalorder 1, %s11
      %p115 = scmp.lt.s32.totalorder %s11, 3
      %p116 = pnand %p114, %p115
      %p117 = pneg %p116
      // Predicated region
      $region25: #{tpu_custom_call.1} parent=5 // pred_check
        _
      $region26: #{tpu_custom_call.1} parent=5 // pred_check_branch
        %119 = sbr.rel (%p116) target = $region28
      $region27: #{tpu_custom_call.1} parent=5 // pred_region
        %s120 = ssub.s32 %s11, 1
        %p121 = scmp.lt.s32.totalorder %s16, 1
        %s122 = scalar_select %p121, %s16, 1
        %s123 = smul.addr %s122, 15
        %s124 = smul.addr %s123, 8
        %s125 = scalar_lea.vmem %s0, %s124
        %p126 = pneg %p37
        %p127 = pneg %p34
        %p128 = pneg %p58
        %p129 = pneg %p55
        %p130 = pneg %p84
        %p131 = pneg %p81
        %s132 = sand.u32 %s71, 1
        %s133 = scalar_lea.sflag [#allocation3], %s132
        %s134 = sand.u32 %s71, 1
        %s135 = smul.addr %s134, 64
        %s136 = scalar_lea.vmem [#allocation2], %s135
        %p137 = scmp.lt.s32.totalorder %s16, 1
        %s138 = scalar_select %p137, %s16, 1
        %s139 = smul.addr %s138, 15
        %s140 = smul.addr %s139, 8
        %s141 = scalar_lea.vmem %s0, %s140
        %v142 = vld [vmem:[%s141] sm:$0xff]
        %v143 = vld [vmem:[%s141 + $0x8] sm:$0xff]
        %v144 = vld [vmem:[%s141 + $0x10] sm:$0xff]
        %v145 = vld [vmem:[%s141 + $0x18] sm:$0xff]
        %v146 = vld [vmem:[%s141 + $0x20] sm:$0xff]
        %v147 = vld [vmem:[%s141 + $0x28] sm:$0xff]
        %v148 = vld [vmem:[%s141 + $0x30] sm:$0xff]
        %v149 = vld [vmem:[%s141 + $0x38] sm:$0xff]
        %v150 = vld [vmem:[%s141 + $0x40] sm:$0xff]
        %v151 = vld [vmem:[%s141 + $0x48] sm:$0xff]
        %v152 = vld [vmem:[%s141] sm:$0xfe]
        %v153 = vld [vmem:[%s141 + $0x8] sm:$0xfe]
        %v154 = vld [vmem:[%s141 + $0x10] sm:$0xfe]
        %v155 = vld [vmem:[%s141 + $0x18] sm:$0xfe]
        %v156 = vld [vmem:[%s141 + $0x20] sm:$0xfe]
        %v157 = vld [vmem:[%s141 + $0x50] sm:$0x1]
        %v158 = vld [vmem:[%s141 + $0x58] sm:$0x1]
        %v159 = vld [vmem:[%s141 + $0x60] sm:$0x1]
        %v160 = vld [vmem:[%s141 + $0x68] sm:$0x1]
        %v161 = vld [vmem:[%s141 + $0x70] sm:$0x1]
        %v162 = vld [vmem:[%s141] sm:$0xfc]
        %v163 = vld [vmem:[%s141 + $0x8] sm:$0xfc]
        %v164 = vld [vmem:[%s141 + $0x10] sm:$0xfc]
        %v165 = vld [vmem:[%s141 + $0x18] sm:$0xfc]
        %v166 = vld [vmem:[%s141 + $0x20] sm:$0xfc]
        %v167 = vld [vmem:[%s141 + $0x50] sm:$0x3]
        %v168 = vld [vmem:[%s141 + $0x58] sm:$0x3]
        %v169 = vld [vmem:[%s141 + $0x60] sm:$0x3]
        %v170 = vld [vmem:[%s141 + $0x68] sm:$0x3]
        %v171 = vld [vmem:[%s141 + $0x70] sm:$0x3]
        %v172 = vld [vmem:[%s141] sm:$0xf8]
        %v173 = vld [vmem:[%s141 + $0x8] sm:$0xf8]
        %v174 = vld [vmem:[%s141 + $0x10] sm:$0xf8]
        %v175 = vld [vmem:[%s141 + $0x18] sm:$0xf8]
        %v176 = vld [vmem:[%s141 + $0x20] sm:$0xf8]
        %v177 = vld [vmem:[%s141 + $0x50] sm:$0x7]
        %v178 = vld [vmem:[%s141 + $0x58] sm:$0x7]
        %v179 = vld [vmem:[%s141 + $0x60] sm:$0x7]
        %v180 = vld [vmem:[%s141 + $0x68] sm:$0x7]
        %v181 = vld [vmem:[%s141 + $0x70] sm:$0x7]
        %v182 = vld [vmem:[%s141] sm:$0xf0]
        %v183 = vld [vmem:[%s141 + $0x8] sm:$0xf0]
        %v184 = vld [vmem:[%s141 + $0x10] sm:$0xf0]
        %v185 = vld [vmem:[%s141 + $0x18] sm:$0xf0]
        %v186 = vld [vmem:[%s141 + $0x20] sm:$0xf0]
        %v187 = vld [vmem:[%s141 + $0x50] sm:$0xf]
        %v188 = vld [vmem:[%s141 + $0x58] sm:$0xf]
        %v189 = vld [vmem:[%s141 + $0x60] sm:$0xf]
        %v190 = vld [vmem:[%s141 + $0x68] sm:$0xf]
        %v191 = vld [vmem:[%s141 + $0x70] sm:$0xf]
        %v192 = vld [vmem:[%s1] ss:$8 sm:$0xf]
        %v193 = vld [vmem:[%s1] ss:$8 sm:$0x10]
        %v194 = vor.u32 %v192, %v193
        %v196 = vlaneseq
        %v197 = vshrl.u32 %v196, 7
        %v198 = vsub.s32 0, %v197
        %v199 = vrot.slane %v194, %v198
        %v200 = vlaneseq
        %v201 = vshrl.u32 %v200, 7
        %v202 = vsub.s32 1, %v201
        %v203 = vrot.slane %v194, %v202
        %v204 = vlaneseq
        %v205 = vshrl.u32 %v204, 7
        %v206 = vsub.s32 2, %v205
        %v207 = vrot.slane %v194, %v206
        %v208 = vlaneseq
        %v209 = vshrl.u32 %v208, 7
        %v210 = vsub.s32 3, %v209
        %v211 = vrot.slane %v194, %v210
        %v216 = vmul.f32 %v142, %v199
        %v217 = vmul.f32 %v143, %v203
        %v218 = vmul.f32 %v144, %v207
        %v219 = vmul.f32 %v145, %v211
        %v220 = vmul.f32 %v147, %v199
        %v221 = vmul.f32 %v148, %v203
        %v222 = vmul.f32 %v149, %v207
        %v223 = vmul.f32 %v150, %v211
        %s224 = scalar_lea.vmem %s1, 5
        %v225 = vld [vmem:[%s224] ss:$8 sm:$0xf]
        %v226 = vld [vmem:[%s224] ss:$8 sm:$0x10]
        %v227 = vor.u32 %v225, %v226
        %v229 = vlaneseq
        %v230 = vshrl.u32 %v229, 7
        %v231 = vsub.s32 0, %v230
        %v232 = vrot.slane %v227, %v231
        %v233 = vlaneseq
        %v234 = vshrl.u32 %v233, 7
        %v235 = vsub.s32 1, %v234
        %v236 = vrot.slane %v227, %v235
        %v237 = vlaneseq
        %v238 = vshrl.u32 %v237, 7
        %v239 = vsub.s32 2, %v238
        %v240 = vrot.slane %v227, %v239
        %v241 = vlaneseq
        %v242 = vshrl.u32 %v241, 7
        %v243 = vsub.s32 3, %v242
        %v244 = vrot.slane %v227, %v243
        %v249 = vmul.f32 %v152, %v232
        %v250 = vmul.f32 %v153, %v236
        %v251 = vmul.f32 %v154, %v240
        %v252 = vmul.f32 %v155, %v244
        %v253 = vmul.f32 %v147, %v232
        %v254 = vmul.f32 %v148, %v236
        %v255 = vmul.f32 %v149, %v240
        %v256 = vmul.f32 %v150, %v244
        %v257 = vmul.f32 %v157, %v232
        %v258 = vmul.f32 %v158, %v236
        %v259 = vmul.f32 %v159, %v240
        %v260 = vmul.f32 %v160, %v244
        %vm273 = vcmask 1046528
        %v274 = vrot.slane %v249, 1
        %v275 = vrot.slane %v253, 1
        %v276 = vsel %vm273, %v274, %v275
        %v277 = vrot.slane %v250, 1
        %v278 = vrot.slane %v254, 1
        %v279 = vsel %vm273, %v277, %v278
        %v280 = vrot.slane %v251, 1
        %v281 = vrot.slane %v255, 1
        %v282 = vsel %vm273, %v280, %v281
        %v283 = vrot.slane %v252, 1
        %v284 = vrot.slane %v256, 1
        %v285 = vsel %vm273, %v283, %v284
        %v286 = vrot.slane %v257, 1
        %v287 = vsel %vm273, %v275, %v286
        %v288 = vrot.slane %v258, 1
        %v289 = vsel %vm273, %v278, %v288
        %v290 = vrot.slane %v259, 1
        %v291 = vsel %vm273, %v281, %v290
        %v292 = vrot.slane %v260, 1
        %v293 = vsel %vm273, %v284, %v292
        %v302 = vadd.f32 %v216, %v276
        %v303 = vadd.f32 %v217, %v279
        %v304 = vadd.f32 %v218, %v282
        %v305 = vadd.f32 %v219, %v285
        %v306 = vadd.f32 %v220, %v287
        %v307 = vadd.f32 %v221, %v289
        %v308 = vadd.f32 %v222, %v291
        %v309 = vadd.f32 %v223, %v293
        %s310 = scalar_lea.vmem %s1, 42
        %v311 = vld [vmem:[%s310] ss:$8 sm:$0xf]
        %v312 = vld [vmem:[%s310] ss:$8 sm:$0x10]
        %v313 = vor.u32 %v311, %v312
        %v315 = vlaneseq
        %v316 = vshrl.u32 %v315, 7
        %v317 = vsub.s32 0, %v316
        %v318 = vrot.slane %v313, %v317
        %v319 = vlaneseq
        %v320 = vshrl.u32 %v319, 7
        %v321 = vsub.s32 1, %v320
        %v322 = vrot.slane %v313, %v321
        %v323 = vlaneseq
        %v324 = vshrl.u32 %v323, 7
        %v325 = vsub.s32 2, %v324
        %v326 = vrot.slane %v313, %v325
        %v327 = vlaneseq
        %v328 = vshrl.u32 %v327, 7
        %v329 = vsub.s32 3, %v328
        %v330 = vrot.slane %v313, %v329
        %v335 = vmul.f32 %v162, %v318
        %v336 = vmul.f32 %v163, %v322
        %v337 = vmul.f32 %v164, %v326
        %v338 = vmul.f32 %v165, %v330
        %v339 = vmul.f32 %v147, %v318
        %v340 = vmul.f32 %v148, %v322
        %v341 = vmul.f32 %v149, %v326
        %v342 = vmul.f32 %v150, %v330
        %v343 = vmul.f32 %v167, %v318
        %v344 = vmul.f32 %v168, %v322
        %v345 = vmul.f32 %v169, %v326
        %v346 = vmul.f32 %v170, %v330
        %vm359 = vcmask 1045504
        %v360 = vrot.slane %v335, 2
        %v361 = vrot.slane %v339, 2
        %v362 = vsel %vm359, %v360, %v361
        %v363 = vrot.slane %v336, 2
        %v364 = vrot.slane %v340, 2
        %v365 = vsel %vm359, %v363, %v364
        %v366 = vrot.slane %v337, 2
        %v367 = vrot.slane %v341, 2
        %v368 = vsel %vm359, %v366, %v367
        %v369 = vrot.slane %v338, 2
        %v370 = vrot.slane %v342, 2
        %v371 = vsel %vm359, %v369, %v370
        %v372 = vrot.slane %v343, 2
        %v373 = vsel %vm359, %v361, %v372
        %v374 = vrot.slane %v344, 2
        %v375 = vsel %vm359, %v364, %v374
        %v376 = vrot.slane %v345, 2
        %v377 = vsel %vm359, %v367, %v376
        %v378 = vrot.slane %v346, 2
        %v379 = vsel %vm359, %v370, %v378
        %v388 = vadd.f32 %v302, %v362
        %v389 = vadd.f32 %v303, %v365
        %v390 = vadd.f32 %v304, %v368
        %v391 = vadd.f32 %v305, %v371
        %v392 = vadd.f32 %v306, %v373
        %v393 = vadd.f32 %v307, %v375
        %v394 = vadd.f32 %v308, %v377
        %v395 = vadd.f32 %v309, %v379
        %s396 = scalar_lea.vmem %s1, 47
        %v397 = vld [vmem:[%s396] ss:$8 sm:$0xf]
        %v398 = vld [vmem:[%s396] ss:$8 sm:$0x10]
        %v399 = vor.u32 %v397, %v398
        %v401 = vlaneseq
        %v402 = vshrl.u32 %v401, 7
        %v403 = vsub.s32 0, %v402
        %v404 = vrot.slane %v399, %v403
        %v405 = vlaneseq
        %v406 = vshrl.u32 %v405, 7
        %v407 = vsub.s32 1, %v406
        %v408 = vrot.slane %v399, %v407
        %v409 = vlaneseq
        %v410 = vshrl.u32 %v409, 7
        %v411 = vsub.s32 2, %v410
        %v412 = vrot.slane %v399, %v411
        %v413 = vlaneseq
        %v414 = vshrl.u32 %v413, 7
        %v415 = vsub.s32 3, %v414
        %v416 = vrot.slane %v399, %v415
        %v421 = vmul.f32 %v172, %v404
        %v422 = vmul.f32 %v173, %v408
        %v423 = vmul.f32 %v174, %v412
        %v424 = vmul.f32 %v175, %v416
        %v425 = vmul.f32 %v147, %v404
        %v426 = vmul.f32 %v148, %v408
        %v427 = vmul.f32 %v149, %v412
        %v428 = vmul.f32 %v150, %v416
        %v429 = vmul.f32 %v177, %v404
        %v430 = vmul.f32 %v178, %v408
        %v431 = vmul.f32 %v179, %v412
        %v432 = vmul.f32 %v180, %v416
        %vm445 = vcmask 1044480
        %v446 = vrot.slane %v421, 3
        %v447 = vrot.slane %v425, 3
        %v448 = vsel %vm445, %v446, %v447
        %v449 = vrot.slane %v422, 3
        %v450 = vrot.slane %v426, 3
        %v451 = vsel %vm445, %v449, %v450
        %v452 = vrot.slane %v423, 3
        %v453 = vrot.slane %v427, 3
        %v454 = vsel %vm445, %v452, %v453
        %v455 = vrot.slane %v424, 3
        %v456 = vrot.slane %v428, 3
        %v457 = vsel %vm445, %v455, %v456
        %v458 = vrot.slane %v429, 3
        %v459 = vsel %vm445, %v447, %v458
        %v460 = vrot.slane %v430, 3
        %v461 = vsel %vm445, %v450, %v460
        %v462 = vrot.slane %v431, 3
        %v463 = vsel %vm445, %v453, %v462
        %v464 = vrot.slane %v432, 3
        %v465 = vsel %vm445, %v456, %v464
        %v474 = vadd.f32 %v388, %v448
        %v475 = vadd.f32 %v389, %v451
        %v476 = vadd.f32 %v390, %v454
        %v477 = vadd.f32 %v391, %v457
        %v478 = vadd.f32 %v392, %v459
        %v479 = vadd.f32 %v393, %v461
        %v480 = vadd.f32 %v394, %v463
        %v481 = vadd.f32 %v395, %v465
        %s482 = scalar_lea.vmem %s1, 84
        %v483 = vld [vmem:[%s482] ss:$8 sm:$0xf]
        %v484 = vld [vmem:[%s482] ss:$8 sm:$0x10]
        %v485 = vor.u32 %v483, %v484
        %v487 = vlaneseq
        %v488 = vshrl.u32 %v487, 7
        %v489 = vsub.s32 0, %v488
        %v490 = vrot.slane %v485, %v489
        %v491 = vlaneseq
        %v492 = vshrl.u32 %v491, 7
        %v493 = vsub.s32 1, %v492
        %v494 = vrot.slane %v485, %v493
        %v495 = vlaneseq
        %v496 = vshrl.u32 %v495, 7
        %v497 = vsub.s32 2, %v496
        %v498 = vrot.slane %v485, %v497
        %v499 = vlaneseq
        %v500 = vshrl.u32 %v499, 7
        %v501 = vsub.s32 3, %v500
        %v502 = vrot.slane %v485, %v501
        %v507 = vmul.f32 %v182, %v490
        %v508 = vmul.f32 %v183, %v494
        %v509 = vmul.f32 %v184, %v498
        %v510 = vmul.f32 %v185, %v502
        %v511 = vmul.f32 %v147, %v490
        %v512 = vmul.f32 %v148, %v494
        %v513 = vmul.f32 %v149, %v498
        %v514 = vmul.f32 %v150, %v502
        %v515 = vmul.f32 %v187, %v490
        %v516 = vmul.f32 %v188, %v494
        %v517 = vmul.f32 %v189, %v498
        %v518 = vmul.f32 %v190, %v502
        %vm531 = vcmask 1043456
        %v532 = vrot.slane %v507, 4
        %v533 = vrot.slane %v511, 4
        %v534 = vsel %vm531, %v532, %v533
        %v535 = vrot.slane %v508, 4
        %v536 = vrot.slane %v512, 4
        %v537 = vsel %vm531, %v535, %v536
        %v538 = vrot.slane %v509, 4
        %v539 = vrot.slane %v513, 4
        %v540 = vsel %vm531, %v538, %v539
        %v541 = vrot.slane %v510, 4
        %v542 = vrot.slane %v514, 4
        %v543 = vsel %vm531, %v541, %v542
        %v544 = vrot.slane %v515, 4
        %v545 = vsel %vm531, %v533, %v544
        %v546 = vrot.slane %v516, 4
        %v547 = vsel %vm531, %v536, %v546
        %v548 = vrot.slane %v517, 4
        %v549 = vsel %vm531, %v539, %v548
        %v550 = vrot.slane %v518, 4
        %v551 = vsel %vm531, %v542, %v550
        %v560 = vadd.f32 %v474, %v534
        %v561 = vadd.f32 %v475, %v537
        %v562 = vadd.f32 %v476, %v540
        %v563 = vadd.f32 %v477, %v543
        %v564 = vadd.f32 %v478, %v545
        %v565 = vadd.f32 %v479, %v547
        %v566 = vadd.f32 %v480, %v549
        %v567 = vadd.f32 %v481, %v551
        %v568 = vadd.f32 %v560, 0.0
        %v569 = vadd.f32 %v561, 0.0
        %v570 = vadd.f32 %v562, 0.0
        %v571 = vadd.f32 %v563, 0.0
        %v572 = vadd.f32 %v564, 0.0
        %v573 = vadd.f32 %v565, 0.0
        %v574 = vadd.f32 %v566, 0.0
        %v575 = vadd.f32 %v567, 0.0
        %s576 = scalar_lea.vmem %s1, 1
        %v577 = vld [vmem:[%s576] ss:$8 sm:$0xf]
        %v578 = vld [vmem:[%s576] ss:$8 sm:$0x10]
        %v579 = vor.u32 %v577, %v578
        %v581 = vlaneseq
        %v582 = vshrl.u32 %v581, 7
        %v583 = vsub.s32 0, %v582
        %v584 = vrot.slane %v579, %v583
        %v585 = vlaneseq
        %v586 = vshrl.u32 %v585, 7
        %v587 = vsub.s32 1, %v586
        %v588 = vrot.slane %v579, %v587
        %v589 = vlaneseq
        %v590 = vshrl.u32 %v589, 7
        %v591 = vsub.s32 2, %v590
        %v592 = vrot.slane %v579, %v591
        %v593 = vlaneseq
        %v594 = vshrl.u32 %v593, 7
        %v595 = vsub.s32 3, %v594
        %v596 = vrot.slane %v579, %v595
        %v597 = vlaneseq
        %v598 = vshrl.u32 %v597, 7
        %v599 = vsub.s32 4, %v598
        %v600 = vrot.slane %v579, %v599
        %v606 = vmul.f32 %v142, %v584
        %v607 = vmul.f32 %v143, %v588
        %v608 = vmul.f32 %v144, %v592
        %v609 = vmul.f32 %v145, %v596
        %v610 = vmul.f32 %v146, %v600
        %v611 = vmul.f32 %v147, %v584
        %v612 = vmul.f32 %v148, %v588
        %v613 = vmul.f32 %v149, %v592
        %v614 = vmul.f32 %v150, %v596
        %v615 = vmul.f32 %v151, %v600
        %s616 = scalar_lea.vmem %s1, 6
        %v617 = vld [vmem:[%s616] ss:$8 sm:$0xf]
        %v618 = vld [vmem:[%s616] ss:$8 sm:$0x10]
        %v619 = vor.u32 %v617, %v618
        %v621 = vlaneseq
        %v622 = vshrl.u32 %v621, 7
        %v623 = vsub.s32 0, %v622
        %v624 = vrot.slane %v619, %v623
        %v625 = vlaneseq
        %v626 = vshrl.u32 %v625, 7
        %v627 = vsub.s32 1, %v626
        %v628 = vrot.slane %v619, %v627
        %v629 = vlaneseq
        %v630 = vshrl.u32 %v629, 7
        %v631 = vsub.s32 2, %v630
        %v632 = vrot.slane %v619, %v631
        %v633 = vlaneseq
        %v634 = vshrl.u32 %v633, 7
        %v635 = vsub.s32 3, %v634
        %v636 = vrot.slane %v619, %v635
        %v637 = vlaneseq
        %v638 = vshrl.u32 %v637, 7
        %v639 = vsub.s32 4, %v638
        %v640 = vrot.slane %v619, %v639
        %v646 = vmul.f32 %v152, %v624
        %v647 = vmul.f32 %v153, %v628
        %v648 = vmul.f32 %v154, %v632
        %v649 = vmul.f32 %v155, %v636
        %v650 = vmul.f32 %v156, %v640
        %v651 = vmul.f32 %v147, %v624
        %v652 = vmul.f32 %v148, %v628
        %v653 = vmul.f32 %v149, %v632
        %v654 = vmul.f32 %v150, %v636
        %v655 = vmul.f32 %v151, %v640
        %v656 = vmul.f32 %v157, %v624
        %v657 = vmul.f32 %v158, %v628
        %v658 = vmul.f32 %v159, %v632
        %v659 = vmul.f32 %v160, %v636
        %v660 = vmul.f32 %v161, %v640
        %v676 = vrot.slane %v646, 1
        %v677 = vrot.slane %v651, 1
        %v678 = vsel %vm273, %v676, %v677
        %v679 = vrot.slane %v647, 1
        %v680 = vrot.slane %v652, 1
        %v681 = vsel %vm273, %v679, %v680
        %v682 = vrot.slane %v648, 1
        %v683 = vrot.slane %v653, 1
        %v684 = vsel %vm273, %v682, %v683
        %v685 = vrot.slane %v649, 1
        %v686 = vrot.slane %v654, 1
        %v687 = vsel %vm273, %v685, %v686
        %v688 = vrot.slane %v650, 1
        %v689 = vrot.slane %v655, 1
        %v690 = vsel %vm273, %v688, %v689
        %v691 = vrot.slane %v656, 1
        %v692 = vsel %vm273, %v677, %v691
        %v693 = vrot.slane %v657, 1
        %v694 = vsel %vm273, %v680, %v693
        %v695 = vrot.slane %v658, 1
        %v696 = vsel %vm273, %v683, %v695
        %v697 = vrot.slane %v659, 1
        %v698 = vsel %vm273, %v686, %v697
        %v699 = vrot.slane %v660, 1
        %v700 = vsel %vm273, %v689, %v699
        %v711 = vadd.f32 %v606, %v678
        %v712 = vadd.f32 %v607, %v681
        %v713 = vadd.f32 %v608, %v684
        %v714 = vadd.f32 %v609, %v687
        %v715 = vadd.f32 %v610, %v690
        %v716 = vadd.f32 %v611, %v692
        %v717 = vadd.f32 %v612, %v694
        %v718 = vadd.f32 %v613, %v696
        %v719 = vadd.f32 %v614, %v698
        %v720 = vadd.f32 %v615, %v700
        %s721 = scalar_lea.vmem %s1, 43
        %v722 = vld [vmem:[%s721] ss:$8 sm:$0xf]
        %v723 = vld [vmem:[%s721] ss:$8 sm:$0x10]
        %v724 = vor.u32 %v722, %v723
        %v726 = vlaneseq
        %v727 = vshrl.u32 %v726, 7
        %v728 = vsub.s32 0, %v727
        %v729 = vrot.slane %v724, %v728
        %v730 = vlaneseq
        %v731 = vshrl.u32 %v730, 7
        %v732 = vsub.s32 1, %v731
        %v733 = vrot.slane %v724, %v732
        %v734 = vlaneseq
        %v735 = vshrl.u32 %v734, 7
        %v736 = vsub.s32 2, %v735
        %v737 = vrot.slane %v724, %v736
        %v738 = vlaneseq
        %v739 = vshrl.u32 %v738, 7
        %v740 = vsub.s32 3, %v739
        %v741 = vrot.slane %v724, %v740
        %v742 = vlaneseq
        %v743 = vshrl.u32 %v742, 7
        %v744 = vsub.s32 4, %v743
        %v745 = vrot.slane %v724, %v744
        %v751 = vmul.f32 %v162, %v729
        %v752 = vmul.f32 %v163, %v733
        %v753 = vmul.f32 %v164, %v737
        %v754 = vmul.f32 %v165, %v741
        %v755 = vmul.f32 %v166, %v745
        %v756 = vmul.f32 %v147, %v729
        %v757 = vmul.f32 %v148, %v733
        %v758 = vmul.f32 %v149, %v737
        %v759 = vmul.f32 %v150, %v741
        %v760 = vmul.f32 %v151, %v745
        %v761 = vmul.f32 %v167, %v729
        %v762 = vmul.f32 %v168, %v733
        %v763 = vmul.f32 %v169, %v737
        %v764 = vmul.f32 %v170, %v741
        %v765 = vmul.f32 %v171, %v745
        %v781 = vrot.slane %v751, 2
        %v782 = vrot.slane %v756, 2
        %v783 = vsel %vm359, %v781, %v782
        %v784 = vrot.slane %v752, 2
        %v785 = vrot.slane %v757, 2
        %v786 = vsel %vm359, %v784, %v785
        %v787 = vrot.slane %v753, 2
        %v788 = vrot.slane %v758, 2
        %v789 = vsel %vm359, %v787, %v788
        %v790 = vrot.slane %v754, 2
        %v791 = vrot.slane %v759, 2
        %v792 = vsel %vm359, %v790, %v791
        %v793 = vrot.slane %v755, 2
        %v794 = vrot.slane %v760, 2
        %v795 = vsel %vm359, %v793, %v794
        %v796 = vrot.slane %v761, 2
        %v797 = vsel %vm359, %v782, %v796
        %v798 = vrot.slane %v762, 2
        %v799 = vsel %vm359, %v785, %v798
        %v800 = vrot.slane %v763, 2
        %v801 = vsel %vm359, %v788, %v800
        %v802 = vrot.slane %v764, 2
        %v803 = vsel %vm359, %v791, %v802
        %v804 = vrot.slane %v765, 2
        %v805 = vsel %vm359, %v794, %v804
        %v816 = vadd.f32 %v711, %v783
        %v817 = vadd.f32 %v712, %v786
        %v818 = vadd.f32 %v713, %v789
        %v819 = vadd.f32 %v714, %v792
        %v820 = vadd.f32 %v715, %v795
        %v821 = vadd.f32 %v716, %v797
        %v822 = vadd.f32 %v717, %v799
        %v823 = vadd.f32 %v718, %v801
        %v824 = vadd.f32 %v719, %v803
        %v825 = vadd.f32 %v720, %v805
        %s826 = scalar_lea.vmem %s1, 80
        %v827 = vld [vmem:[%s826] ss:$8 sm:$0xf]
        %v828 = vld [vmem:[%s826] ss:$8 sm:$0x10]
        %v829 = vor.u32 %v827, %v828
        %v831 = vlaneseq
        %v832 = vshrl.u32 %v831, 7
        %v833 = vsub.s32 0, %v832
        %v834 = vrot.slane %v829, %v833
        %v835 = vlaneseq
        %v836 = vshrl.u32 %v835, 7
        %v837 = vsub.s32 1, %v836
        %v838 = vrot.slane %v829, %v837
        %v839 = vlaneseq
        %v840 = vshrl.u32 %v839, 7
        %v841 = vsub.s32 2, %v840
        %v842 = vrot.slane %v829, %v841
        %v843 = vlaneseq
        %v844 = vshrl.u32 %v843, 7
        %v845 = vsub.s32 3, %v844
        %v846 = vrot.slane %v829, %v845
        %v847 = vlaneseq
        %v848 = vshrl.u32 %v847, 7
        %v849 = vsub.s32 4, %v848
        %v850 = vrot.slane %v829, %v849
        %v856 = vmul.f32 %v172, %v834
        %v857 = vmul.f32 %v173, %v838
        %v858 = vmul.f32 %v174, %v842
        %v859 = vmul.f32 %v175, %v846
        %v860 = vmul.f32 %v176, %v850
        %v861 = vmul.f32 %v147, %v834
        %v862 = vmul.f32 %v148, %v838
        %v863 = vmul.f32 %v149, %v842
        %v864 = vmul.f32 %v150, %v846
        %v865 = vmul.f32 %v151, %v850
        %v866 = vmul.f32 %v177, %v834
        %v867 = vmul.f32 %v178, %v838
        %v868 = vmul.f32 %v179, %v842
        %v869 = vmul.f32 %v180, %v846
        %v870 = vmul.f32 %v181, %v850
        %v886 = vrot.slane %v856, 3
        %v887 = vrot.slane %v861, 3
        %v888 = vsel %vm445, %v886, %v887
        %v889 = vrot.slane %v857, 3
        %v890 = vrot.slane %v862, 3
        %v891 = vsel %vm445, %v889, %v890
        %v892 = vrot.slane %v858, 3
        %v893 = vrot.slane %v863, 3
        %v894 = vsel %vm445, %v892, %v893
        %v895 = vrot.slane %v859, 3
        %v896 = vrot.slane %v864, 3
        %v897 = vsel %vm445, %v895, %v896
        %v898 = vrot.slane %v860, 3
        %v899 = vrot.slane %v865, 3
        %v900 = vsel %vm445, %v898, %v899
        %v901 = vrot.slane %v866, 3
        %v902 = vsel %vm445, %v887, %v901
        %v903 = vrot.slane %v867, 3
        %v904 = vsel %vm445, %v890, %v903
        %v905 = vrot.slane %v868, 3
        %v906 = vsel %vm445, %v893, %v905
        %v907 = vrot.slane %v869, 3
        %v908 = vsel %vm445, %v896, %v907
        %v909 = vrot.slane %v870, 3
        %v910 = vsel %vm445, %v899, %v909
        %v921 = vadd.f32 %v816, %v888
        %v922 = vadd.f32 %v817, %v891
        %v923 = vadd.f32 %v818, %v894
        %v924 = vadd.f32 %v819, %v897
        %v925 = vadd.f32 %v820, %v900
        %v926 = vadd.f32 %v821, %v902
        %v927 = vadd.f32 %v822, %v904
        %v928 = vadd.f32 %v823, %v906
        %v929 = vadd.f32 %v824, %v908
        %v930 = vadd.f32 %v825, %v910
        %s931 = scalar_lea.vmem %s1, 85
        %v932 = vld [vmem:[%s931] ss:$8 sm:$0xf]
        %v933 = vld [vmem:[%s931] ss:$8 sm:$0x10]
        %v934 = vor.u32 %v932, %v933
        %v936 = vlaneseq
        %v937 = vshrl.u32 %v936, 7
        %v938 = vsub.s32 0, %v937
        %v939 = vrot.slane %v934, %v938
        %v940 = vlaneseq
        %v941 = vshrl.u32 %v940, 7
        %v942 = vsub.s32 1, %v941
        %v943 = vrot.slane %v934, %v942
        %v944 = vlaneseq
        %v945 = vshrl.u32 %v944, 7
        %v946 = vsub.s32 2, %v945
        %v947 = vrot.slane %v934, %v946
        %v948 = vlaneseq
        %v949 = vshrl.u32 %v948, 7
        %v950 = vsub.s32 3, %v949
        %v951 = vrot.slane %v934, %v950
        %v952 = vlaneseq
        %v953 = vshrl.u32 %v952, 7
        %v954 = vsub.s32 4, %v953
        %v955 = vrot.slane %v934, %v954
        %v961 = vmul.f32 %v182, %v939
        %v962 = vmul.f32 %v183, %v943
        %v963 = vmul.f32 %v184, %v947
        %v964 = vmul.f32 %v185, %v951
        %v965 = vmul.f32 %v186, %v955
        %v966 = vmul.f32 %v147, %v939
        %v967 = vmul.f32 %v148, %v943
        %v968 = vmul.f32 %v149, %v947
        %v969 = vmul.f32 %v150, %v951
        %v970 = vmul.f32 %v151, %v955
        %v971 = vmul.f32 %v187, %v939
        %v972 = vmul.f32 %v188, %v943
        %v973 = vmul.f32 %v189, %v947
        %v974 = vmul.f32 %v190, %v951
        %v975 = vmul.f32 %v191, %v955
        %v991 = vrot.slane %v961, 4
        %v992 = vrot.slane %v966, 4
        %v993 = vsel %vm531, %v991, %v992
        %v994 = vrot.slane %v962, 4
        %v995 = vrot.slane %v967, 4
        %v996 = vsel %vm531, %v994, %v995
        %v997 = vrot.slane %v963, 4
        %v998 = vrot.slane %v968, 4
        %v999 = vsel %vm531, %v997, %v998
        %v1000 = vrot.slane %v964, 4
        %v1001 = vrot.slane %v969, 4
        %v1002 = vsel %vm531, %v1000, %v1001
        %v1003 = vrot.slane %v965, 4
        %v1004 = vrot.slane %v970, 4
        %v1005 = vsel %vm531, %v1003, %v1004
        %v1006 = vrot.slane %v971, 4
        %v1007 = vsel %vm531, %v992, %v1006
        %v1008 = vrot.slane %v972, 4
        %v1009 = vsel %vm531, %v995, %v1008
        %v1010 = vrot.slane %v973, 4
        %v1011 = vsel %vm531, %v998, %v1010
        %v1012 = vrot.slane %v974, 4
        %v1013 = vsel %vm531, %v1001, %v1012
        %v1014 = vrot.slane %v975, 4
        %v1015 = vsel %vm531, %v1004, %v1014
        %v1026 = vadd.f32 %v921, %v993
        %v1027 = vadd.f32 %v922, %v996
        %v1028 = vadd.f32 %v923, %v999
        %v1029 = vadd.f32 %v924, %v1002
        %v1030 = vadd.f32 %v925, %v1005
        %v1031 = vadd.f32 %v926, %v1007
        %v1032 = vadd.f32 %v927, %v1009
        %v1033 = vadd.f32 %v928, %v1011
        %v1034 = vadd.f32 %v929, %v1013
        %v1035 = vadd.f32 %v930, %v1015
        %1046 = vrot.lane.b32.xlu0 %v1026, 96
        %v1047 = vpop.permute.xlu0 %1046
        %1048 = vrot.lane.b32.xlu0 %v1027, 96
        %v1049 = vpop.permute.xlu0 %1048
        %1050 = vrot.lane.b32.xlu0 %v1028, 96
        %v1051 = vpop.permute.xlu0 %1050
        %1052 = vrot.lane.b32.xlu0 %v1029, 96
        %v1053 = vpop.permute.xlu0 %1052
        %1054 = vrot.lane.b32.xlu0 %v1030, 96
        %v1055 = vpop.permute.xlu0 %1054
        %1056 = vrot.lane.b32.xlu0 %v1031, 96
        %v1057 = vpop.permute.xlu0 %1056
        %1058 = vrot.lane.b32.xlu0 %v1032, 96
        %v1059 = vpop.permute.xlu0 %1058
        %1060 = vrot.lane.b32.xlu0 %v1033, 96
        %v1061 = vpop.permute.xlu0 %1060
        %1062 = vrot.lane.b32.xlu0 %v1034, 96
        %v1063 = vpop.permute.xlu0 %1062
        %1064 = vrot.lane.b32.xlu0 %v1035, 96
        %v1065 = vpop.permute.xlu0 %1064
        %vm1066 = vcmask 785408
        %v1067 = vsel %vm1066, %v1047, %v1049
        %v1068 = vsel %vm1066, %v1049, %v1051
        %v1069 = vsel %vm1066, %v1051, %v1053
        %v1070 = vsel %vm1066, %v1053, %v1055
        %v1071 = vsel %vm1066, %v1057, %v1059
        %v1072 = vsel %vm1066, %v1059, %v1061
        %v1073 = vsel %vm1066, %v1061, %v1063
        %v1074 = vsel %vm1066, %v1063, %v1065
        %v1083 = vadd.f32 %v568, %v1067
        %v1084 = vadd.f32 %v569, %v1068
        %v1085 = vadd.f32 %v570, %v1069
        %v1086 = vadd.f32 %v571, %v1070
        %v1087 = vadd.f32 %v572, %v1071
        %v1088 = vadd.f32 %v573, %v1072
        %v1089 = vadd.f32 %v574, %v1073
        %v1090 = vadd.f32 %v575, %v1074
        %s1091 = scalar_lea.vmem %s1, 2
        %v1092 = vld [vmem:[%s1091] ss:$8 sm:$0xf]
        %v1093 = vld [vmem:[%s1091] ss:$8 sm:$0x10]
        %v1094 = vor.u32 %v1092, %v1093
        %v1096 = vlaneseq
        %v1097 = vshrl.u32 %v1096, 7
        %v1098 = vsub.s32 0, %v1097
        %v1099 = vrot.slane %v1094, %v1098
        %v1100 = vlaneseq
        %v1101 = vshrl.u32 %v1100, 7
        %v1102 = vsub.s32 1, %v1101
        %v1103 = vrot.slane %v1094, %v1102
        %v1104 = vlaneseq
        %v1105 = vshrl.u32 %v1104, 7
        %v1106 = vsub.s32 2, %v1105
        %v1107 = vrot.slane %v1094, %v1106
        %v1108 = vlaneseq
        %v1109 = vshrl.u32 %v1108, 7
        %v1110 = vsub.s32 3, %v1109
        %v1111 = vrot.slane %v1094, %v1110
        %v1112 = vlaneseq
        %v1113 = vshrl.u32 %v1112, 7
        %v1114 = vsub.s32 4, %v1113
        %v1115 = vrot.slane %v1094, %v1114
        %v1121 = vmul.f32 %v142, %v1099
        %v1122 = vmul.f32 %v143, %v1103
        %v1123 = vmul.f32 %v144, %v1107
        %v1124 = vmul.f32 %v145, %v1111
        %v1125 = vmul.f32 %v146, %v1115
        %v1126 = vmul.f32 %v147, %v1099
        %v1127 = vmul.f32 %v148, %v1103
        %v1128 = vmul.f32 %v149, %v1107
        %v1129 = vmul.f32 %v150, %v1111
        %v1130 = vmul.f32 %v151, %v1115
        %s1131 = scalar_lea.vmem %s1, 7
        %v1132 = vld [vmem:[%s1131] ss:$8 sm:$0xf]
        %v1133 = vld [vmem:[%s1131] ss:$8 sm:$0x10]
        %v1134 = vor.u32 %v1132, %v1133
        %v1136 = vlaneseq
        %v1137 = vshrl.u32 %v1136, 7
        %v1138 = vsub.s32 0, %v1137
        %v1139 = vrot.slane %v1134, %v1138
        %v1140 = vlaneseq
        %v1141 = vshrl.u32 %v1140, 7
        %v1142 = vsub.s32 1, %v1141
        %v1143 = vrot.slane %v1134, %v1142
        %v1144 = vlaneseq
        %v1145 = vshrl.u32 %v1144, 7
        %v1146 = vsub.s32 2, %v1145
        %v1147 = vrot.slane %v1134, %v1146
        %v1148 = vlaneseq
        %v1149 = vshrl.u32 %v1148, 7
        %v1150 = vsub.s32 3, %v1149
        %v1151 = vrot.slane %v1134, %v1150
        %v1152 = vlaneseq
        %v1153 = vshrl.u32 %v1152, 7
        %v1154 = vsub.s32 4, %v1153
        %v1155 = vrot.slane %v1134, %v1154
        %v1161 = vmul.f32 %v152, %v1139
        %v1162 = vmul.f32 %v153, %v1143
        %v1163 = vmul.f32 %v154, %v1147
        %v1164 = vmul.f32 %v155, %v1151
        %v1165 = vmul.f32 %v156, %v1155
        %v1166 = vmul.f32 %v147, %v1139
        %v1167 = vmul.f32 %v148, %v1143
        %v1168 = vmul.f32 %v149, %v1147
        %v1169 = vmul.f32 %v150, %v1151
        %v1170 = vmul.f32 %v151, %v1155
        %v1171 = vmul.f32 %v157, %v1139
        %v1172 = vmul.f32 %v158, %v1143
        %v1173 = vmul.f32 %v159, %v1147
        %v1174 = vmul.f32 %v160, %v1151
        %v1175 = vmul.f32 %v161, %v1155
        %v1191 = vrot.slane %v1161, 1
        %v1192 = vrot.slane %v1166, 1
        %v1193 = vsel %vm273, %v1191, %v1192
        %v1194 = vrot.slane %v1162, 1
        %v1195 = vrot.slane %v1167, 1
        %v1196 = vsel %vm273, %v1194, %v1195
        %v1197 = vrot.slane %v1163, 1
        %v1198 = vrot.slane %v1168, 1
        %v1199 = vsel %vm273, %v1197, %v1198
        %v1200 = vrot.slane %v1164, 1
        %v1201 = vrot.slane %v1169, 1
        %v1202 = vsel %vm273, %v1200, %v1201
        %v1203 = vrot.slane %v1165, 1
        %v1204 = vrot.slane %v1170, 1
        %v1205 = vsel %vm273, %v1203, %v1204
        %v1206 = vrot.slane %v1171, 1
        %v1207 = vsel %vm273, %v1192, %v1206
        %v1208 = vrot.slane %v1172, 1
        %v1209 = vsel %vm273, %v1195, %v1208
        %v1210 = vrot.slane %v1173, 1
        %v1211 = vsel %vm273, %v1198, %v1210
        %v1212 = vrot.slane %v1174, 1
        %v1213 = vsel %vm273, %v1201, %v1212
        %v1214 = vrot.slane %v1175, 1
        %v1215 = vsel %vm273, %v1204, %v1214
        %v1226 = vadd.f32 %v1121, %v1193
        %v1227 = vadd.f32 %v1122, %v1196
        %v1228 = vadd.f32 %v1123, %v1199
        %v1229 = vadd.f32 %v1124, %v1202
        %v1230 = vadd.f32 %v1125, %v1205
        %v1231 = vadd.f32 %v1126, %v1207
        %v1232 = vadd.f32 %v1127, %v1209
        %v1233 = vadd.f32 %v1128, %v1211
        %v1234 = vadd.f32 %v1129, %v1213
        %v1235 = vadd.f32 %v1130, %v1215
        %s1236 = scalar_lea.vmem %s1, 44
        %v1237 = vld [vmem:[%s1236] ss:$8 sm:$0xf]
        %v1238 = vld [vmem:[%s1236] ss:$8 sm:$0x10]
        %v1239 = vor.u32 %v1237, %v1238
        %v1241 = vlaneseq
        %v1242 = vshrl.u32 %v1241, 7
        %v1243 = vsub.s32 0, %v1242
        %v1244 = vrot.slane %v1239, %v1243
        %v1245 = vlaneseq
        %v1246 = vshrl.u32 %v1245, 7
        %v1247 = vsub.s32 1, %v1246
        %v1248 = vrot.slane %v1239, %v1247
        %v1249 = vlaneseq
        %v1250 = vshrl.u32 %v1249, 7
        %v1251 = vsub.s32 2, %v1250
        %v1252 = vrot.slane %v1239, %v1251
        %v1253 = vlaneseq
        %v1254 = vshrl.u32 %v1253, 7
        %v1255 = vsub.s32 3, %v1254
        %v1256 = vrot.slane %v1239, %v1255
        %v1257 = vlaneseq
        %v1258 = vshrl.u32 %v1257, 7
        %v1259 = vsub.s32 4, %v1258
        %v1260 = vrot.slane %v1239, %v1259
        %v1266 = vmul.f32 %v162, %v1244
        %v1267 = vmul.f32 %v163, %v1248
        %v1268 = vmul.f32 %v164, %v1252
        %v1269 = vmul.f32 %v165, %v1256
        %v1270 = vmul.f32 %v166, %v1260
        %v1271 = vmul.f32 %v147, %v1244
        %v1272 = vmul.f32 %v148, %v1248
        %v1273 = vmul.f32 %v149, %v1252
        %v1274 = vmul.f32 %v150, %v1256
        %v1275 = vmul.f32 %v151, %v1260
        %v1276 = vmul.f32 %v167, %v1244
        %v1277 = vmul.f32 %v168, %v1248
        %v1278 = vmul.f32 %v169, %v1252
        %v1279 = vmul.f32 %v170, %v1256
        %v1280 = vmul.f32 %v171, %v1260
        %v1296 = vrot.slane %v1266, 2
        %v1297 = vrot.slane %v1271, 2
        %v1298 = vsel %vm359, %v1296, %v1297
        %v1299 = vrot.slane %v1267, 2
        %v1300 = vrot.slane %v1272, 2
        %v1301 = vsel %vm359, %v1299, %v1300
        %v1302 = vrot.slane %v1268, 2
        %v1303 = vrot.slane %v1273, 2
        %v1304 = vsel %vm359, %v1302, %v1303
        %v1305 = vrot.slane %v1269, 2
        %v1306 = vrot.slane %v1274, 2
        %v1307 = vsel %vm359, %v1305, %v1306
        %v1308 = vrot.slane %v1270, 2
        %v1309 = vrot.slane %v1275, 2
        %v1310 = vsel %vm359, %v1308, %v1309
        %v1311 = vrot.slane %v1276, 2
        %v1312 = vsel %vm359, %v1297, %v1311
        %v1313 = vrot.slane %v1277, 2
        %v1314 = vsel %vm359, %v1300, %v1313
        %v1315 = vrot.slane %v1278, 2
        %v1316 = vsel %vm359, %v1303, %v1315
        %v1317 = vrot.slane %v1279, 2
        %v1318 = vsel %vm359, %v1306, %v1317
        %v1319 = vrot.slane %v1280, 2
        %v1320 = vsel %vm359, %v1309, %v1319
        %v1331 = vadd.f32 %v1226, %v1298
        %v1332 = vadd.f32 %v1227, %v1301
        %v1333 = vadd.f32 %v1228, %v1304
        %v1334 = vadd.f32 %v1229, %v1307
        %v1335 = vadd.f32 %v1230, %v1310
        %v1336 = vadd.f32 %v1231, %v1312
        %v1337 = vadd.f32 %v1232, %v1314
        %v1338 = vadd.f32 %v1233, %v1316
        %v1339 = vadd.f32 %v1234, %v1318
        %v1340 = vadd.f32 %v1235, %v1320
        %s1341 = scalar_lea.vmem %s1, 81
        %v1342 = vld [vmem:[%s1341] ss:$8 sm:$0xf]
        %v1343 = vld [vmem:[%s1341] ss:$8 sm:$0x10]
        %v1344 = vor.u32 %v1342, %v1343
        %v1346 = vlaneseq
        %v1347 = vshrl.u32 %v1346, 7
        %v1348 = vsub.s32 0, %v1347
        %v1349 = vrot.slane %v1344, %v1348
        %v1350 = vlaneseq
        %v1351 = vshrl.u32 %v1350, 7
        %v1352 = vsub.s32 1, %v1351
        %v1353 = vrot.slane %v1344, %v1352
        %v1354 = vlaneseq
        %v1355 = vshrl.u32 %v1354, 7
        %v1356 = vsub.s32 2, %v1355
        %v1357 = vrot.slane %v1344, %v1356
        %v1358 = vlaneseq
        %v1359 = vshrl.u32 %v1358, 7
        %v1360 = vsub.s32 3, %v1359
        %v1361 = vrot.slane %v1344, %v1360
        %v1362 = vlaneseq
        %v1363 = vshrl.u32 %v1362, 7
        %v1364 = vsub.s32 4, %v1363
        %v1365 = vrot.slane %v1344, %v1364
        %v1371 = vmul.f32 %v172, %v1349
        %v1372 = vmul.f32 %v173, %v1353
        %v1373 = vmul.f32 %v174, %v1357
        %v1374 = vmul.f32 %v175, %v1361
        %v1375 = vmul.f32 %v176, %v1365
        %v1376 = vmul.f32 %v147, %v1349
        %v1377 = vmul.f32 %v148, %v1353
        %v1378 = vmul.f32 %v149, %v1357
        %v1379 = vmul.f32 %v150, %v1361
        %v1380 = vmul.f32 %v151, %v1365
        %v1381 = vmul.f32 %v177, %v1349
        %v1382 = vmul.f32 %v178, %v1353
        %v1383 = vmul.f32 %v179, %v1357
        %v1384 = vmul.f32 %v180, %v1361
        %v1385 = vmul.f32 %v181, %v1365
        %v1401 = vrot.slane %v1371, 3
        %v1402 = vrot.slane %v1376, 3
        %v1403 = vsel %vm445, %v1401, %v1402
        %v1404 = vrot.slane %v1372, 3
        %v1405 = vrot.slane %v1377, 3
        %v1406 = vsel %vm445, %v1404, %v1405
        %v1407 = vrot.slane %v1373, 3
        %v1408 = vrot.slane %v1378, 3
        %v1409 = vsel %vm445, %v1407, %v1408
        %v1410 = vrot.slane %v1374, 3
        %v1411 = vrot.slane %v1379, 3
        %v1412 = vsel %vm445, %v1410, %v1411
        %v1413 = vrot.slane %v1375, 3
        %v1414 = vrot.slane %v1380, 3
        %v1415 = vsel %vm445, %v1413, %v1414
        %v1416 = vrot.slane %v1381, 3
        %v1417 = vsel %vm445, %v1402, %v1416
        %v1418 = vrot.slane %v1382, 3
        %v1419 = vsel %vm445, %v1405, %v1418
        %v1420 = vrot.slane %v1383, 3
        %v1421 = vsel %vm445, %v1408, %v1420
        %v1422 = vrot.slane %v1384, 3
        %v1423 = vsel %vm445, %v1411, %v1422
        %v1424 = vrot.slane %v1385, 3
        %v1425 = vsel %vm445, %v1414, %v1424
        %v1436 = vadd.f32 %v1331, %v1403
        %v1437 = vadd.f32 %v1332, %v1406
        %v1438 = vadd.f32 %v1333, %v1409
        %v1439 = vadd.f32 %v1334, %v1412
        %v1440 = vadd.f32 %v1335, %v1415
        %v1441 = vadd.f32 %v1336, %v1417
        %v1442 = vadd.f32 %v1337, %v1419
        %v1443 = vadd.f32 %v1338, %v1421
        %v1444 = vadd.f32 %v1339, %v1423
        %v1445 = vadd.f32 %v1340, %v1425
        %s1446 = scalar_lea.vmem %s1, 86
        %v1447 = vld [vmem:[%s1446] ss:$8 sm:$0xf]
        %v1448 = vld [vmem:[%s1446] ss:$8 sm:$0x10]
        %v1449 = vor.u32 %v1447, %v1448
        %v1451 = vlaneseq
        %v1452 = vshrl.u32 %v1451, 7
        %v1453 = vsub.s32 0, %v1452
        %v1454 = vrot.slane %v1449, %v1453
        %v1455 = vlaneseq
        %v1456 = vshrl.u32 %v1455, 7
        %v1457 = vsub.s32 1, %v1456
        %v1458 = vrot.slane %v1449, %v1457
        %v1459 = vlaneseq
        %v1460 = vshrl.u32 %v1459, 7
        %v1461 = vsub.s32 2, %v1460
        %v1462 = vrot.slane %v1449, %v1461
        %v1463 = vlaneseq
        %v1464 = vshrl.u32 %v1463, 7
        %v1465 = vsub.s32 3, %v1464
        %v1466 = vrot.slane %v1449, %v1465
        %v1467 = vlaneseq
        %v1468 = vshrl.u32 %v1467, 7
        %v1469 = vsub.s32 4, %v1468
        %v1470 = vrot.slane %v1449, %v1469
        %v1476 = vmul.f32 %v182, %v1454
        %v1477 = vmul.f32 %v183, %v1458
        %v1478 = vmul.f32 %v184, %v1462
        %v1479 = vmul.f32 %v185, %v1466
        %v1480 = vmul.f32 %v186, %v1470
        %v1481 = vmul.f32 %v147, %v1454
        %v1482 = vmul.f32 %v148, %v1458
        %v1483 = vmul.f32 %v149, %v1462
        %v1484 = vmul.f32 %v150, %v1466
        %v1485 = vmul.f32 %v151, %v1470
        %v1486 = vmul.f32 %v187, %v1454
        %v1487 = vmul.f32 %v188, %v1458
        %v1488 = vmul.f32 %v189, %v1462
        %v1489 = vmul.f32 %v190, %v1466
        %v1490 = vmul.f32 %v191, %v1470
        %v1506 = vrot.slane %v1476, 4
        %v1507 = vrot.slane %v1481, 4
        %v1508 = vsel %vm531, %v1506, %v1507
        %v1509 = vrot.slane %v1477, 4
        %v1510 = vrot.slane %v1482, 4
        %v1511 = vsel %vm531, %v1509, %v1510
        %v1512 = vrot.slane %v1478, 4
        %v1513 = vrot.slane %v1483, 4
        %v1514 = vsel %vm531, %v1512, %v1513
        %v1515 = vrot.slane %v1479, 4
        %v1516 = vrot.slane %v1484, 4
        %v1517 = vsel %vm531, %v1515, %v1516
        %v1518 = vrot.slane %v1480, 4
        %v1519 = vrot.slane %v1485, 4
        %v1520 = vsel %vm531, %v1518, %v1519
        %v1521 = vrot.slane %v1486, 4
        %v1522 = vsel %vm531, %v1507, %v1521
        %v1523 = vrot.slane %v1487, 4
        %v1524 = vsel %vm531, %v1510, %v1523
        %v1525 = vrot.slane %v1488, 4
        %v1526 = vsel %vm531, %v1513, %v1525
        %v1527 = vrot.slane %v1489, 4
        %v1528 = vsel %vm531, %v1516, %v1527
        %v1529 = vrot.slane %v1490, 4
        %v1530 = vsel %vm531, %v1519, %v1529
        %v1541 = vadd.f32 %v1436, %v1508
        %v1542 = vadd.f32 %v1437, %v1511
        %v1543 = vadd.f32 %v1438, %v1514
        %v1544 = vadd.f32 %v1439, %v1517
        %v1545 = vadd.f32 %v1440, %v1520
        %v1546 = vadd.f32 %v1441, %v1522
        %v1547 = vadd.f32 %v1442, %v1524
        %v1548 = vadd.f32 %v1443, %v1526
        %v1549 = vadd.f32 %v1444, %v1528
        %v1550 = vadd.f32 %v1445, %v1530
        %1561 = vrot.lane.b32.xlu0 %v1541, 64
        %v1562 = vpop.permute.xlu0 %1561
        %1563 = vrot.lane.b32.xlu0 %v1542, 64
        %v1564 = vpop.permute.xlu0 %1563
        %1565 = vrot.lane.b32.xlu0 %v1543, 64
        %v1566 = vpop.permute.xlu0 %1565
        %1567 = vrot.lane.b32.xlu0 %v1544, 64
        %v1568 = vpop.permute.xlu0 %1567
        %1569 = vrot.lane.b32.xlu0 %v1545, 64
        %v1570 = vpop.permute.xlu0 %1569
        %1571 = vrot.lane.b32.xlu0 %v1546, 64
        %v1572 = vpop.permute.xlu0 %1571
        %1573 = vrot.lane.b32.xlu0 %v1547, 64
        %v1574 = vpop.permute.xlu0 %1573
        %1575 = vrot.lane.b32.xlu0 %v1548, 64
        %v1576 = vpop.permute.xlu0 %1575
        %1577 = vrot.lane.b32.xlu0 %v1549, 64
        %v1578 = vpop.permute.xlu0 %1577
        %1579 = vrot.lane.b32.xlu0 %v1550, 64
        %v1580 = vpop.permute.xlu0 %1579
        %vm1581 = vcmask 523264
        %v1582 = vsel %vm1581, %v1562, %v1564
        %v1583 = vsel %vm1581, %v1564, %v1566
        %v1584 = vsel %vm1581, %v1566, %v1568
        %v1585 = vsel %vm1581, %v1568, %v1570
        %v1586 = vsel %vm1581, %v1572, %v1574
        %v1587 = vsel %vm1581, %v1574, %v1576
        %v1588 = vsel %vm1581, %v1576, %v1578
        %v1589 = vsel %vm1581, %v1578, %v1580
        %v1598 = vadd.f32 %v1083, %v1582
        %v1599 = vadd.f32 %v1084, %v1583
        %v1600 = vadd.f32 %v1085, %v1584
        %v1601 = vadd.f32 %v1086, %v1585
        %v1602 = vadd.f32 %v1087, %v1586
        %v1603 = vadd.f32 %v1088, %v1587
        %v1604 = vadd.f32 %v1089, %v1588
        %v1605 = vadd.f32 %v1090, %v1589
        %s1606 = scalar_lea.vmem %s1, 3
        %v1607 = vld [vmem:[%s1606] ss:$8 sm:$0xf]
        %v1608 = vld [vmem:[%s1606] ss:$8 sm:$0x10]
        %v1609 = vor.u32 %v1607, %v1608
        %v1611 = vlaneseq
        %v1612 = vshrl.u32 %v1611, 7
        %v1613 = vsub.s32 0, %v1612
        %v1614 = vrot.slane %v1609, %v1613
        %v1615 = vlaneseq
        %v1616 = vshrl.u32 %v1615, 7
        %v1617 = vsub.s32 1, %v1616
        %v1618 = vrot.slane %v1609, %v1617
        %v1619 = vlaneseq
        %v1620 = vshrl.u32 %v1619, 7
        %v1621 = vsub.s32 2, %v1620
        %v1622 = vrot.slane %v1609, %v1621
        %v1623 = vlaneseq
        %v1624 = vshrl.u32 %v1623, 7
        %v1625 = vsub.s32 3, %v1624
        %v1626 = vrot.slane %v1609, %v1625
        %v1627 = vlaneseq
        %v1628 = vshrl.u32 %v1627, 7
        %v1629 = vsub.s32 4, %v1628
        %v1630 = vrot.slane %v1609, %v1629
        %v1636 = vmul.f32 %v142, %v1614
        %v1637 = vmul.f32 %v143, %v1618
        %v1638 = vmul.f32 %v144, %v1622
        %v1639 = vmul.f32 %v145, %v1626
        %v1640 = vmul.f32 %v146, %v1630
        %v1641 = vmul.f32 %v147, %v1614
        %v1642 = vmul.f32 %v148, %v1618
        %v1643 = vmul.f32 %v149, %v1622
        %v1644 = vmul.f32 %v150, %v1626
        %v1645 = vmul.f32 %v151, %v1630
        %s1646 = scalar_lea.vmem %s1, 40
        %v1647 = vld [vmem:[%s1646] ss:$8 sm:$0xf]
        %v1648 = vld [vmem:[%s1646] ss:$8 sm:$0x10]
        %v1649 = vor.u32 %v1647, %v1648
        %v1651 = vlaneseq
        %v1652 = vshrl.u32 %v1651, 7
        %v1653 = vsub.s32 0, %v1652
        %v1654 = vrot.slane %v1649, %v1653
        %v1655 = vlaneseq
        %v1656 = vshrl.u32 %v1655, 7
        %v1657 = vsub.s32 1, %v1656
        %v1658 = vrot.slane %v1649, %v1657
        %v1659 = vlaneseq
        %v1660 = vshrl.u32 %v1659, 7
        %v1661 = vsub.s32 2, %v1660
        %v1662 = vrot.slane %v1649, %v1661
        %v1663 = vlaneseq
        %v1664 = vshrl.u32 %v1663, 7
        %v1665 = vsub.s32 3, %v1664
        %v1666 = vrot.slane %v1649, %v1665
        %v1667 = vlaneseq
        %v1668 = vshrl.u32 %v1667, 7
        %v1669 = vsub.s32 4, %v1668
        %v1670 = vrot.slane %v1649, %v1669
        %v1676 = vmul.f32 %v152, %v1654
        %v1677 = vmul.f32 %v153, %v1658
        %v1678 = vmul.f32 %v154, %v1662
        %v1679 = vmul.f32 %v155, %v1666
        %v1680 = vmul.f32 %v156, %v1670
        %v1681 = vmul.f32 %v147, %v1654
        %v1682 = vmul.f32 %v148, %v1658
        %v1683 = vmul.f32 %v149, %v1662
        %v1684 = vmul.f32 %v150, %v1666
        %v1685 = vmul.f32 %v151, %v1670
        %v1686 = vmul.f32 %v157, %v1654
        %v1687 = vmul.f32 %v158, %v1658
        %v1688 = vmul.f32 %v159, %v1662
        %v1689 = vmul.f32 %v160, %v1666
        %v1690 = vmul.f32 %v161, %v1670
        %v1706 = vrot.slane %v1676, 1
        %v1707 = vrot.slane %v1681, 1
        %v1708 = vsel %vm273, %v1706, %v1707
        %v1709 = vrot.slane %v1677, 1
        %v1710 = vrot.slane %v1682, 1
        %v1711 = vsel %vm273, %v1709, %v1710
        %v1712 = vrot.slane %v1678, 1
        %v1713 = vrot.slane %v1683, 1
        %v1714 = vsel %vm273, %v1712, %v1713
        %v1715 = vrot.slane %v1679, 1
        %v1716 = vrot.slane %v1684, 1
        %v1717 = vsel %vm273, %v1715, %v1716
        %v1718 = vrot.slane %v1680, 1
        %v1719 = vrot.slane %v1685, 1
        %v1720 = vsel %vm273, %v1718, %v1719
        %v1721 = vrot.slane %v1686, 1
        %v1722 = vsel %vm273, %v1707, %v1721
        %v1723 = vrot.slane %v1687, 1
        %v1724 = vsel %vm273, %v1710, %v1723
        %v1725 = vrot.slane %v1688, 1
        %v1726 = vsel %vm273, %v1713, %v1725
        %v1727 = vrot.slane %v1689, 1
        %v1728 = vsel %vm273, %v1716, %v1727
        %v1729 = vrot.slane %v1690, 1
        %v1730 = vsel %vm273, %v1719, %v1729
        %v1741 = vadd.f32 %v1636, %v1708
        %v1742 = vadd.f32 %v1637, %v1711
        %v1743 = vadd.f32 %v1638, %v1714
        %v1744 = vadd.f32 %v1639, %v1717
        %v1745 = vadd.f32 %v1640, %v1720
        %v1746 = vadd.f32 %v1641, %v1722
        %v1747 = vadd.f32 %v1642, %v1724
        %v1748 = vadd.f32 %v1643, %v1726
        %v1749 = vadd.f32 %v1644, %v1728
        %v1750 = vadd.f32 %v1645, %v1730
        %s1751 = scalar_lea.vmem %s1, 45
        %v1752 = vld [vmem:[%s1751] ss:$8 sm:$0xf]
        %v1753 = vld [vmem:[%s1751] ss:$8 sm:$0x10]
        %v1754 = vor.u32 %v1752, %v1753
        %v1756 = vlaneseq
        %v1757 = vshrl.u32 %v1756, 7
        %v1758 = vsub.s32 0, %v1757
        %v1759 = vrot.slane %v1754, %v1758
        %v1760 = vlaneseq
        %v1761 = vshrl.u32 %v1760, 7
        %v1762 = vsub.s32 1, %v1761
        %v1763 = vrot.slane %v1754, %v1762
        %v1764 = vlaneseq
        %v1765 = vshrl.u32 %v1764, 7
        %v1766 = vsub.s32 2, %v1765
        %v1767 = vrot.slane %v1754, %v1766
        %v1768 = vlaneseq
        %v1769 = vshrl.u32 %v1768, 7
        %v1770 = vsub.s32 3, %v1769
        %v1771 = vrot.slane %v1754, %v1770
        %v1772 = vlaneseq
        %v1773 = vshrl.u32 %v1772, 7
        %v1774 = vsub.s32 4, %v1773
        %v1775 = vrot.slane %v1754, %v1774
        %v1781 = vmul.f32 %v162, %v1759
        %v1782 = vmul.f32 %v163, %v1763
        %v1783 = vmul.f32 %v164, %v1767
        %v1784 = vmul.f32 %v165, %v1771
        %v1785 = vmul.f32 %v166, %v1775
        %v1786 = vmul.f32 %v147, %v1759
        %v1787 = vmul.f32 %v148, %v1763
        %v1788 = vmul.f32 %v149, %v1767
        %v1789 = vmul.f32 %v150, %v1771
        %v1790 = vmul.f32 %v151, %v1775
        %v1791 = vmul.f32 %v167, %v1759
        %v1792 = vmul.f32 %v168, %v1763
        %v1793 = vmul.f32 %v169, %v1767
        %v1794 = vmul.f32 %v170, %v1771
        %v1795 = vmul.f32 %v171, %v1775
        %v1811 = vrot.slane %v1781, 2
        %v1812 = vrot.slane %v1786, 2
        %v1813 = vsel %vm359, %v1811, %v1812
        %v1814 = vrot.slane %v1782, 2
        %v1815 = vrot.slane %v1787, 2
        %v1816 = vsel %vm359, %v1814, %v1815
        %v1817 = vrot.slane %v1783, 2
        %v1818 = vrot.slane %v1788, 2
        %v1819 = vsel %vm359, %v1817, %v1818
        %v1820 = vrot.slane %v1784, 2
        %v1821 = vrot.slane %v1789, 2
        %v1822 = vsel %vm359, %v1820, %v1821
        %v1823 = vrot.slane %v1785, 2
        %v1824 = vrot.slane %v1790, 2
        %v1825 = vsel %vm359, %v1823, %v1824
        %v1826 = vrot.slane %v1791, 2
        %v1827 = vsel %vm359, %v1812, %v1826
        %v1828 = vrot.slane %v1792, 2
        %v1829 = vsel %vm359, %v1815, %v1828
        %v1830 = vrot.slane %v1793, 2
        %v1831 = vsel %vm359, %v1818, %v1830
        %v1832 = vrot.slane %v1794, 2
        %v1833 = vsel %vm359, %v1821, %v1832
        %v1834 = vrot.slane %v1795, 2
        %v1835 = vsel %vm359, %v1824, %v1834
        %v1846 = vadd.f32 %v1741, %v1813
        %v1847 = vadd.f32 %v1742, %v1816
        %v1848 = vadd.f32 %v1743, %v1819
        %v1849 = vadd.f32 %v1744, %v1822
        %v1850 = vadd.f32 %v1745, %v1825
        %v1851 = vadd.f32 %v1746, %v1827
        %v1852 = vadd.f32 %v1747, %v1829
        %v1853 = vadd.f32 %v1748, %v1831
        %v1854 = vadd.f32 %v1749, %v1833
        %v1855 = vadd.f32 %v1750, %v1835
        %s1856 = scalar_lea.vmem %s1, 82
        %v1857 = vld [vmem:[%s1856] ss:$8 sm:$0xf]
        %v1858 = vld [vmem:[%s1856] ss:$8 sm:$0x10]
        %v1859 = vor.u32 %v1857, %v1858
        %v1861 = vlaneseq
        %v1862 = vshrl.u32 %v1861, 7
        %v1863 = vsub.s32 0, %v1862
        %v1864 = vrot.slane %v1859, %v1863
        %v1865 = vlaneseq
        %v1866 = vshrl.u32 %v1865, 7
        %v1867 = vsub.s32 1, %v1866
        %v1868 = vrot.slane %v1859, %v1867
        %v1869 = vlaneseq
        %v1870 = vshrl.u32 %v1869, 7
        %v1871 = vsub.s32 2, %v1870
        %v1872 = vrot.slane %v1859, %v1871
        %v1873 = vlaneseq
        %v1874 = vshrl.u32 %v1873, 7
        %v1875 = vsub.s32 3, %v1874
        %v1876 = vrot.slane %v1859, %v1875
        %v1877 = vlaneseq
        %v1878 = vshrl.u32 %v1877, 7
        %v1879 = vsub.s32 4, %v1878
        %v1880 = vrot.slane %v1859, %v1879
        %v1886 = vmul.f32 %v172, %v1864
        %v1887 = vmul.f32 %v173, %v1868
        %v1888 = vmul.f32 %v174, %v1872
        %v1889 = vmul.f32 %v175, %v1876
        %v1890 = vmul.f32 %v176, %v1880
        %v1891 = vmul.f32 %v147, %v1864
        %v1892 = vmul.f32 %v148, %v1868
        %v1893 = vmul.f32 %v149, %v1872
        %v1894 = vmul.f32 %v150, %v1876
        %v1895 = vmul.f32 %v151, %v1880
        %v1896 = vmul.f32 %v177, %v1864
        %v1897 = vmul.f32 %v178, %v1868
        %v1898 = vmul.f32 %v179, %v1872
        %v1899 = vmul.f32 %v180, %v1876
        %v1900 = vmul.f32 %v181, %v1880
        %v1916 = vrot.slane %v1886, 3
        %v1917 = vrot.slane %v1891, 3
        %v1918 = vsel %vm445, %v1916, %v1917
        %v1919 = vrot.slane %v1887, 3
        %v1920 = vrot.slane %v1892, 3
        %v1921 = vsel %vm445, %v1919, %v1920
        %v1922 = vrot.slane %v1888, 3
        %v1923 = vrot.slane %v1893, 3
        %v1924 = vsel %vm445, %v1922, %v1923
        %v1925 = vrot.slane %v1889, 3
        %v1926 = vrot.slane %v1894, 3
        %v1927 = vsel %vm445, %v1925, %v1926
        %v1928 = vrot.slane %v1890, 3
        %v1929 = vrot.slane %v1895, 3
        %v1930 = vsel %vm445, %v1928, %v1929
        %v1931 = vrot.slane %v1896, 3
        %v1932 = vsel %vm445, %v1917, %v1931
        %v1933 = vrot.slane %v1897, 3
        %v1934 = vsel %vm445, %v1920, %v1933
        %v1935 = vrot.slane %v1898, 3
        %v1936 = vsel %vm445, %v1923, %v1935
        %v1937 = vrot.slane %v1899, 3
        %v1938 = vsel %vm445, %v1926, %v1937
        %v1939 = vrot.slane %v1900, 3
        %v1940 = vsel %vm445, %v1929, %v1939
        %v1951 = vadd.f32 %v1846, %v1918
        %v1952 = vadd.f32 %v1847, %v1921
        %v1953 = vadd.f32 %v1848, %v1924
        %v1954 = vadd.f32 %v1849, %v1927
        %v1955 = vadd.f32 %v1850, %v1930
        %v1956 = vadd.f32 %v1851, %v1932
        %v1957 = vadd.f32 %v1852, %v1934
        %v1958 = vadd.f32 %v1853, %v1936
        %v1959 = vadd.f32 %v1854, %v1938
        %v1960 = vadd.f32 %v1855, %v1940
        %s1961 = scalar_lea.vmem %s1, 87
        %v1962 = vld [vmem:[%s1961] ss:$8 sm:$0xf]
        %v1963 = vld [vmem:[%s1961] ss:$8 sm:$0x10]
        %v1964 = vor.u32 %v1962, %v1963
        %v1966 = vlaneseq
        %v1967 = vshrl.u32 %v1966, 7
        %v1968 = vsub.s32 0, %v1967
        %v1969 = vrot.slane %v1964, %v1968
        %v1970 = vlaneseq
        %v1971 = vshrl.u32 %v1970, 7
        %v1972 = vsub.s32 1, %v1971
        %v1973 = vrot.slane %v1964, %v1972
        %v1974 = vlaneseq
        %v1975 = vshrl.u32 %v1974, 7
        %v1976 = vsub.s32 2, %v1975
        %v1977 = vrot.slane %v1964, %v1976
        %v1978 = vlaneseq
        %v1979 = vshrl.u32 %v1978, 7
        %v1980 = vsub.s32 3, %v1979
        %v1981 = vrot.slane %v1964, %v1980
        %v1982 = vlaneseq
        %v1983 = vshrl.u32 %v1982, 7
        %v1984 = vsub.s32 4, %v1983
        %v1985 = vrot.slane %v1964, %v1984
        %v1991 = vmul.f32 %v182, %v1969
        %v1992 = vmul.f32 %v183, %v1973
        %v1993 = vmul.f32 %v184, %v1977
        %v1994 = vmul.f32 %v185, %v1981
        %v1995 = vmul.f32 %v186, %v1985
        %v1996 = vmul.f32 %v147, %v1969
        %v1997 = vmul.f32 %v148, %v1973
        %v1998 = vmul.f32 %v149, %v1977
        %v1999 = vmul.f32 %v150, %v1981
        %v2000 = vmul.f32 %v151, %v1985
        %v2001 = vmul.f32 %v187, %v1969
        %v2002 = vmul.f32 %v188, %v1973
        %v2003 = vmul.f32 %v189, %v1977
        %v2004 = vmul.f32 %v190, %v1981
        %v2005 = vmul.f32 %v191, %v1985
        %v2021 = vrot.slane %v1991, 4
        %v2022 = vrot.slane %v1996, 4
        %v2023 = vsel %vm531, %v2021, %v2022
        %v2024 = vrot.slane %v1992, 4
        %v2025 = vrot.slane %v1997, 4
        %v2026 = vsel %vm531, %v2024, %v2025
        %v2027 = vrot.slane %v1993, 4
        %v2028 = vrot.slane %v1998, 4
        %v2029 = vsel %vm531, %v2027, %v2028
        %v2030 = vrot.slane %v1994, 4
        %v2031 = vrot.slane %v1999, 4
        %v2032 = vsel %vm531, %v2030, %v2031
        %v2033 = vrot.slane %v1995, 4
        %v2034 = vrot.slane %v2000, 4
        %v2035 = vsel %vm531, %v2033, %v2034
        %v2036 = vrot.slane %v2001, 4
        %v2037 = vsel %vm531, %v2022, %v2036
        %v2038 = vrot.slane %v2002, 4
        %v2039 = vsel %vm531, %v2025, %v2038
        %v2040 = vrot.slane %v2003, 4
        %v2041 = vsel %vm531, %v2028, %v2040
        %v2042 = vrot.slane %v2004, 4
        %v2043 = vsel %vm531, %v2031, %v2042
        %v2044 = vrot.slane %v2005, 4
        %v2045 = vsel %vm531, %v2034, %v2044
        %v2056 = vadd.f32 %v1951, %v2023
        %v2057 = vadd.f32 %v1952, %v2026
        %v2058 = vadd.f32 %v1953, %v2029
        %v2059 = vadd.f32 %v1954, %v2032
        %v2060 = vadd.f32 %v1955, %v2035
        %v2061 = vadd.f32 %v1956, %v2037
        %v2062 = vadd.f32 %v1957, %v2039
        %v2063 = vadd.f32 %v1958, %v2041
        %v2064 = vadd.f32 %v1959, %v2043
        %v2065 = vadd.f32 %v1960, %v2045
        %2076 = vrot.lane.b32.xlu0 %v2056, 32
        %v2077 = vpop.permute.xlu0 %2076
        %2078 = vrot.lane.b32.xlu0 %v2057, 32
        %v2079 = vpop.permute.xlu0 %2078
        %2080 = vrot.lane.b32.xlu0 %v2058, 32
        %v2081 = vpop.permute.xlu0 %2080
        %2082 = vrot.lane.b32.xlu0 %v2059, 32
        %v2083 = vpop.permute.xlu0 %2082
        %2084 = vrot.lane.b32.xlu0 %v2060, 32
        %v2085 = vpop.permute.xlu0 %2084
        %2086 = vrot.lane.b32.xlu0 %v2061, 32
        %v2087 = vpop.permute.xlu0 %2086
        %2088 = vrot.lane.b32.xlu0 %v2062, 32
        %v2089 = vpop.permute.xlu0 %2088
        %2090 = vrot.lane.b32.xlu0 %v2063, 32
        %v2091 = vpop.permute.xlu0 %2090
        %2092 = vrot.lane.b32.xlu0 %v2064, 32
        %v2093 = vpop.permute.xlu0 %2092
        %2094 = vrot.lane.b32.xlu0 %v2065, 32
        %v2095 = vpop.permute.xlu0 %2094
        %vm2096 = vcmask 261120
        %v2097 = vsel %vm2096, %v2077, %v2079
        %v2098 = vsel %vm2096, %v2079, %v2081
        %v2099 = vsel %vm2096, %v2081, %v2083
        %v2100 = vsel %vm2096, %v2083, %v2085
        %v2101 = vsel %vm2096, %v2087, %v2089
        %v2102 = vsel %vm2096, %v2089, %v2091
        %v2103 = vsel %vm2096, %v2091, %v2093
        %v2104 = vsel %vm2096, %v2093, %v2095
        %v2113 = vadd.f32 %v1598, %v2097
        %v2114 = vadd.f32 %v1599, %v2098
        %v2115 = vadd.f32 %v1600, %v2099
        %v2116 = vadd.f32 %v1601, %v2100
        %v2117 = vadd.f32 %v1602, %v2101
        %v2118 = vadd.f32 %v1603, %v2102
        %v2119 = vadd.f32 %v1604, %v2103
        %v2120 = vadd.f32 %v1605, %v2104
        %s2121 = scalar_lea.vmem %s1, 4
        %v2122 = vld [vmem:[%s2121] ss:$8 sm:$0xf]
        %v2123 = vld [vmem:[%s2121] ss:$8 sm:$0x10]
        %v2124 = vor.u32 %v2122, %v2123
        %v2126 = vlaneseq
        %v2127 = vshrl.u32 %v2126, 7
        %v2128 = vsub.s32 1, %v2127
        %v2129 = vrot.slane %v2124, %v2128
        %v2130 = vlaneseq
        %v2131 = vshrl.u32 %v2130, 7
        %v2132 = vsub.s32 2, %v2131
        %v2133 = vrot.slane %v2124, %v2132
        %v2134 = vlaneseq
        %v2135 = vshrl.u32 %v2134, 7
        %v2136 = vsub.s32 3, %v2135
        %v2137 = vrot.slane %v2124, %v2136
        %v2138 = vlaneseq
        %v2139 = vshrl.u32 %v2138, 7
        %v2140 = vsub.s32 4, %v2139
        %v2141 = vrot.slane %v2124, %v2140
        %v2146 = vmul.f32 %v143, %v2129
        %v2147 = vmul.f32 %v144, %v2133
        %v2148 = vmul.f32 %v145, %v2137
        %v2149 = vmul.f32 %v146, %v2141
        %v2150 = vmul.f32 %v148, %v2129
        %v2151 = vmul.f32 %v149, %v2133
        %v2152 = vmul.f32 %v150, %v2137
        %v2153 = vmul.f32 %v151, %v2141
        %s2154 = scalar_lea.vmem %s1, 41
        %v2155 = vld [vmem:[%s2154] ss:$8 sm:$0xf]
        %v2156 = vld [vmem:[%s2154] ss:$8 sm:$0x10]
        %v2157 = vor.u32 %v2155, %v2156
        %v2159 = vlaneseq
        %v2160 = vshrl.u32 %v2159, 7
        %v2161 = vsub.s32 1, %v2160
        %v2162 = vrot.slane %v2157, %v2161
        %v2163 = vlaneseq
        %v2164 = vshrl.u32 %v2163, 7
        %v2165 = vsub.s32 2, %v2164
        %v2166 = vrot.slane %v2157, %v2165
        %v2167 = vlaneseq
        %v2168 = vshrl.u32 %v2167, 7
        %v2169 = vsub.s32 3, %v2168
        %v2170 = vrot.slane %v2157, %v2169
        %v2171 = vlaneseq
        %v2172 = vshrl.u32 %v2171, 7
        %v2173 = vsub.s32 4, %v2172
        %v2174 = vrot.slane %v2157, %v2173
        %v2179 = vmul.f32 %v153, %v2162
        %v2180 = vmul.f32 %v154, %v2166
        %v2181 = vmul.f32 %v155, %v2170
        %v2182 = vmul.f32 %v156, %v2174
        %v2183 = vmul.f32 %v148, %v2162
        %v2184 = vmul.f32 %v149, %v2166
        %v2185 = vmul.f32 %v150, %v2170
        %v2186 = vmul.f32 %v151, %v2174
        %v2187 = vmul.f32 %v158, %v2162
        %v2188 = vmul.f32 %v159, %v2166
        %v2189 = vmul.f32 %v160, %v2170
        %v2190 = vmul.f32 %v161, %v2174
        %v2203 = vrot.slane %v2179, 1
        %v2204 = vrot.slane %v2183, 1
        %v2205 = vsel %vm273, %v2203, %v2204
        %v2206 = vrot.slane %v2180, 1
        %v2207 = vrot.slane %v2184, 1
        %v2208 = vsel %vm273, %v2206, %v2207
        %v2209 = vrot.slane %v2181, 1
        %v2210 = vrot.slane %v2185, 1
        %v2211 = vsel %vm273, %v2209, %v2210
        %v2212 = vrot.slane %v2182, 1
        %v2213 = vrot.slane %v2186, 1
        %v2214 = vsel %vm273, %v2212, %v2213
        %v2215 = vrot.slane %v2187, 1
        %v2216 = vsel %vm273, %v2204, %v2215
        %v2217 = vrot.slane %v2188, 1
        %v2218 = vsel %vm273, %v2207, %v2217
        %v2219 = vrot.slane %v2189, 1
        %v2220 = vsel %vm273, %v2210, %v2219
        %v2221 = vrot.slane %v2190, 1
        %v2222 = vsel %vm273, %v2213, %v2221
        %v2231 = vadd.f32 %v2146, %v2205
        %v2232 = vadd.f32 %v2147, %v2208
        %v2233 = vadd.f32 %v2148, %v2211
        %v2234 = vadd.f32 %v2149, %v2214
        %v2235 = vadd.f32 %v2150, %v2216
        %v2236 = vadd.f32 %v2151, %v2218
        %v2237 = vadd.f32 %v2152, %v2220
        %v2238 = vadd.f32 %v2153, %v2222
        %s2239 = scalar_lea.vmem %s1, 46
        %v2240 = vld [vmem:[%s2239] ss:$8 sm:$0xf]
        %v2241 = vld [vmem:[%s2239] ss:$8 sm:$0x10]
        %v2242 = vor.u32 %v2240, %v2241
        %v2244 = vlaneseq
        %v2245 = vshrl.u32 %v2244, 7
        %v2246 = vsub.s32 1, %v2245
        %v2247 = vrot.slane %v2242, %v2246
        %v2248 = vlaneseq
        %v2249 = vshrl.u32 %v2248, 7
        %v2250 = vsub.s32 2, %v2249
        %v2251 = vrot.slane %v2242, %v2250
        %v2252 = vlaneseq
        %v2253 = vshrl.u32 %v2252, 7
        %v2254 = vsub.s32 3, %v2253
        %v2255 = vrot.slane %v2242, %v2254
        %v2256 = vlaneseq
        %v2257 = vshrl.u32 %v2256, 7
        %v2258 = vsub.s32 4, %v2257
        %v2259 = vrot.slane %v2242, %v2258
        %v2264 = vmul.f32 %v163, %v2247
        %v2265 = vmul.f32 %v164, %v2251
        %v2266 = vmul.f32 %v165, %v2255
        %v2267 = vmul.f32 %v166, %v2259
        %v2268 = vmul.f32 %v148, %v2247
        %v2269 = vmul.f32 %v149, %v2251
        %v2270 = vmul.f32 %v150, %v2255
        %v2271 = vmul.f32 %v151, %v2259
        %v2272 = vmul.f32 %v168, %v2247
        %v2273 = vmul.f32 %v169, %v2251
        %v2274 = vmul.f32 %v170, %v2255
        %v2275 = vmul.f32 %v171, %v2259
        %v2288 = vrot.slane %v2264, 2
        %v2289 = vrot.slane %v2268, 2
        %v2290 = vsel %vm359, %v2288, %v2289
        %v2291 = vrot.slane %v2265, 2
        %v2292 = vrot.slane %v2269, 2
        %v2293 = vsel %vm359, %v2291, %v2292
        %v2294 = vrot.slane %v2266, 2
        %v2295 = vrot.slane %v2270, 2
        %v2296 = vsel %vm359, %v2294, %v2295
        %v2297 = vrot.slane %v2267, 2
        %v2298 = vrot.slane %v2271, 2
        %v2299 = vsel %vm359, %v2297, %v2298
        %v2300 = vrot.slane %v2272, 2
        %v2301 = vsel %vm359, %v2289, %v2300
        %v2302 = vrot.slane %v2273, 2
        %v2303 = vsel %vm359, %v2292, %v2302
        %v2304 = vrot.slane %v2274, 2
        %v2305 = vsel %vm359, %v2295, %v2304
        %v2306 = vrot.slane %v2275, 2
        %v2307 = vsel %vm359, %v2298, %v2306
        %v2316 = vadd.f32 %v2231, %v2290
        %v2317 = vadd.f32 %v2232, %v2293
        %v2318 = vadd.f32 %v2233, %v2296
        %v2319 = vadd.f32 %v2234, %v2299
        %v2320 = vadd.f32 %v2235, %v2301
        %v2321 = vadd.f32 %v2236, %v2303
        %v2322 = vadd.f32 %v2237, %v2305
        %v2323 = vadd.f32 %v2238, %v2307
        %s2324 = scalar_lea.vmem %s1, 83
        %v2325 = vld [vmem:[%s2324] ss:$8 sm:$0xf]
        %v2326 = vld [vmem:[%s2324] ss:$8 sm:$0x10]
        %v2327 = vor.u32 %v2325, %v2326
        %v2329 = vlaneseq
        %v2330 = vshrl.u32 %v2329, 7
        %v2331 = vsub.s32 1, %v2330
        %v2332 = vrot.slane %v2327, %v2331
        %v2333 = vlaneseq
        %v2334 = vshrl.u32 %v2333, 7
        %v2335 = vsub.s32 2, %v2334
        %v2336 = vrot.slane %v2327, %v2335
        %v2337 = vlaneseq
        %v2338 = vshrl.u32 %v2337, 7
        %v2339 = vsub.s32 3, %v2338
        %v2340 = vrot.slane %v2327, %v2339
        %v2341 = vlaneseq
        %v2342 = vshrl.u32 %v2341, 7
        %v2343 = vsub.s32 4, %v2342
        %v2344 = vrot.slane %v2327, %v2343
        %v2349 = vmul.f32 %v173, %v2332
        %v2350 = vmul.f32 %v174, %v2336
        %v2351 = vmul.f32 %v175, %v2340
        %v2352 = vmul.f32 %v176, %v2344
        %v2353 = vmul.f32 %v148, %v2332
        %v2354 = vmul.f32 %v149, %v2336
        %v2355 = vmul.f32 %v150, %v2340
        %v2356 = vmul.f32 %v151, %v2344
        %v2357 = vmul.f32 %v178, %v2332
        %v2358 = vmul.f32 %v179, %v2336
        %v2359 = vmul.f32 %v180, %v2340
        %v2360 = vmul.f32 %v181, %v2344
        %v2373 = vrot.slane %v2349, 3
        %v2374 = vrot.slane %v2353, 3
        %v2375 = vsel %vm445, %v2373, %v2374
        %v2376 = vrot.slane %v2350, 3
        %v2377 = vrot.slane %v2354, 3
        %v2378 = vsel %vm445, %v2376, %v2377
        %v2379 = vrot.slane %v2351, 3
        %v2380 = vrot.slane %v2355, 3
        %v2381 = vsel %vm445, %v2379, %v2380
        %v2382 = vrot.slane %v2352, 3
        %v2383 = vrot.slane %v2356, 3
        %v2384 = vsel %vm445, %v2382, %v2383
        %v2385 = vrot.slane %v2357, 3
        %v2386 = vsel %vm445, %v2374, %v2385
        %v2387 = vrot.slane %v2358, 3
        %v2388 = vsel %vm445, %v2377, %v2387
        %v2389 = vrot.slane %v2359, 3
        %v2390 = vsel %vm445, %v2380, %v2389
        %v2391 = vrot.slane %v2360, 3
        %v2392 = vsel %vm445, %v2383, %v2391
        %v2401 = vadd.f32 %v2316, %v2375
        %v2402 = vadd.f32 %v2317, %v2378
        %v2403 = vadd.f32 %v2318, %v2381
        %v2404 = vadd.f32 %v2319, %v2384
        %v2405 = vadd.f32 %v2320, %v2386
        %v2406 = vadd.f32 %v2321, %v2388
        %v2407 = vadd.f32 %v2322, %v2390
        %v2408 = vadd.f32 %v2323, %v2392
        %s2409 = scalar_lea.vmem %s1, 120
        %v2410 = vld [vmem:[%s2409] ss:$8 sm:$0xf]
        %v2411 = vld [vmem:[%s2409] ss:$8 sm:$0x10]
        %v2412 = vor.u32 %v2410, %v2411
        %v2414 = vlaneseq
        %v2415 = vshrl.u32 %v2414, 7
        %v2416 = vsub.s32 1, %v2415
        %v2417 = vrot.slane %v2412, %v2416
        %v2418 = vlaneseq
        %v2419 = vshrl.u32 %v2418, 7
        %v2420 = vsub.s32 2, %v2419
        %v2421 = vrot.slane %v2412, %v2420
        %v2422 = vlaneseq
        %v2423 = vshrl.u32 %v2422, 7
        %v2424 = vsub.s32 3, %v2423
        %v2425 = vrot.slane %v2412, %v2424
        %v2426 = vlaneseq
        %v2427 = vshrl.u32 %v2426, 7
        %v2428 = vsub.s32 4, %v2427
        %v2429 = vrot.slane %v2412, %v2428
        %v2434 = vmul.f32 %v183, %v2417
        %v2435 = vmul.f32 %v184, %v2421
        %v2436 = vmul.f32 %v185, %v2425
        %v2437 = vmul.f32 %v186, %v2429
        %v2438 = vmul.f32 %v148, %v2417
        %v2439 = vmul.f32 %v149, %v2421
        %v2440 = vmul.f32 %v150, %v2425
        %v2441 = vmul.f32 %v151, %v2429
        %v2442 = vmul.f32 %v188, %v2417
        %v2443 = vmul.f32 %v189, %v2421
        %v2444 = vmul.f32 %v190, %v2425
        %v2445 = vmul.f32 %v191, %v2429
        %v2458 = vrot.slane %v2434, 4
        %v2459 = vrot.slane %v2438, 4
        %v2460 = vsel %vm531, %v2458, %v2459
        %v2461 = vrot.slane %v2435, 4
        %v2462 = vrot.slane %v2439, 4
        %v2463 = vsel %vm531, %v2461, %v2462
        %v2464 = vrot.slane %v2436, 4
        %v2465 = vrot.slane %v2440, 4
        %v2466 = vsel %vm531, %v2464, %v2465
        %v2467 = vrot.slane %v2437, 4
        %v2468 = vrot.slane %v2441, 4
        %v2469 = vsel %vm531, %v2467, %v2468
        %v2470 = vrot.slane %v2442, 4
        %v2471 = vsel %vm531, %v2459, %v2470
        %v2472 = vrot.slane %v2443, 4
        %v2473 = vsel %vm531, %v2462, %v2472
        %v2474 = vrot.slane %v2444, 4
        %v2475 = vsel %vm531, %v2465, %v2474
        %v2476 = vrot.slane %v2445, 4
        %v2477 = vsel %vm531, %v2468, %v2476
        %v2486 = vadd.f32 %v2401, %v2460
        %v2487 = vadd.f32 %v2402, %v2463
        %v2488 = vadd.f32 %v2403, %v2466
        %v2489 = vadd.f32 %v2404, %v2469
        %v2490 = vadd.f32 %v2405, %v2471
        %v2491 = vadd.f32 %v2406, %v2473
        %v2492 = vadd.f32 %v2407, %v2475
        %v2493 = vadd.f32 %v2408, %v2477
        %v2494 = vadd.f32 %v2113, %v2486
        %v2495 = vadd.f32 %v2114, %v2487
        %v2496 = vadd.f32 %v2115, %v2488
        %v2497 = vadd.f32 %v2116, %v2489
        %v2498 = vadd.f32 %v2117, %v2490
        %v2499 = vadd.f32 %v2118, %v2491
        %v2500 = vadd.f32 %v2119, %v2492
        %v2501 = vadd.f32 %v2120, %v2493
        %2502 = vst [vmem:[%s136] sm:$0xff] %v2494
        %2503 = vst [vmem:[%s136 + $0x8] sm:$0xff] %v2495
        %2504 = vst [vmem:[%s136 + $0x10] sm:$0xff] %v2496
        %2505 = vst [vmem:[%s136 + $0x18] sm:$0xff] %v2497
        %2506 = vst [vmem:[%s136 + $0x20] sm:$0xff] %v2498
        %2507 = vst [vmem:[%s136 + $0x28] sm:$0xff] %v2499
        %2508 = vst [vmem:[%s136 + $0x30] sm:$0xff] %v2500
        %2509 = vst [vmem:[%s136 + $0x38] sm:$0xff] %v2501
        %s2510 = sand.u32 %s71, 1
        %s2511 = scalar_lea.sflag [#allocation3], %s2510
        %s2512 = sand.u32 %s71, 1
        %s2513 = smul.addr %s2512, 64
        %s2514 = scalar_lea.vmem [#allocation2], %s2513
        // Predicated region
        $region29: #{tpu_custom_call.1} parent=27 // pred_check
          %p2515 = pneg %p81
        $region30: #{tpu_custom_call.1} parent=27 // pred_check_branch
          %2517 = sbr.rel (%p2515) target = $region32
        $region31: #{tpu_custom_call.1} parent=27 // pred_region
          %s2519 = ssub.s32 1024, 1024
          %2520 = vsyncadd %s2511, %s2519
          %s2521 = smul.addr %s16, 8
          %s2522 = smul.addr %s2521, 128
          %s2523 = scalar_lea.hbm %s2, %s2522
          %s2524 = sshll.u32 %s2514, 4
          %s2525 = int_to_ptr.vmem [resolvable:$true] %s2524
          %2530 = dma.vmem_to_hbm [thread:$0]  %s2525, 1024, %s2523, %s2511, 512, 512, 32
        $region32: #{tpu_custom_call.1} parent=27 // pred_fallthru
          _
      $region28: #{tpu_custom_call.1} parent=5 // pred_fallthru
        _
      %p2531 = scmp.le.s32.totalorder 2, %s11
      // Predicated region
      $region33: #{tpu_custom_call.1} parent=5 // pred_check
        %p2532 = pneg %p2531
      $region34: #{tpu_custom_call.1} parent=5 // pred_check_branch
        %2534 = sbr.rel (%p2532) target = $region36
      $region35: #{tpu_custom_call.1} parent=5 // pred_region
        %s2535 = ssub.s32 %s11, 2
        // Predicated region
        $region37: #{tpu_custom_call.1} parent=35 // pred_check
          %p2536 = pneg %p87
        $region38: #{tpu_custom_call.1} parent=35 // pred_check_branch
          %2538 = sbr.rel (%p2536) target = $region40
        $region39: #{tpu_custom_call.1} parent=35 // pred_region
          %s2539 = sand.u32 %s72, 1
          %s2540 = scalar_lea.sflag [#allocation3], %s2539
          %s2541 = sand.u32 %s72, 1
          %s2542 = smul.addr %s2541, 64
          %s2543 = scalar_lea.vmem [#allocation2], %s2542
          %2544 = dma.done %s2540, 1024
        $region40: #{tpu_custom_call.1} parent=35 // pred_fallthru
          _
      $region36: #{tpu_custom_call.1} parent=5 // pred_fallthru
        _
    $region6: #{tpu_custom_call.1} parent=1 // loop_footer
      %s15 = sadd.s32 1, %s11
    $region7: #{tpu_custom_call.1} parent=1 // loop_footer_branch
      %10 = sbr.rel target = $region3
    $region8: #{tpu_custom_call.1} parent=1 // loop_exit
      _
    %2545 = vsyncpa [#allocation3], 1
    %s2546 = scalar_lea.sflag [#allocation3], 1
    %2547 = vsyncpa %s2546, 1

</llo_original>
